<compile_context>
chip_gen: v7x
topology: tpu7x:2x2x1
jax: 0.10.0
libtpu: 0.0.40
codegen_flags: <defaults>
</compile_context>

<pallas_src>
import jax
import jax.numpy as jnp
from jax.experimental import pallas as pl
from jax.experimental.pallas import tpu as pltpu

# Model hyper-parameters (small, but consistent with the module's structure).
H = 32            # encoder_hidden_size
NUM_HEADS = 4     # encoder.config.num_attention_heads
HD = H // NUM_HEADS
DEC = 16          # decoder_hidden_size
FF = 4 * H        # dim_feedforward
LN_EPS = 1e-5

# Row offsets inside the packed 32-lane weight slab.
_R_WFQ = 0                 # w_fuse[:H]   (query part)     rows [0, 32)
_R_WFC = H                 # w_fuse[H:]   (corpus part)    rows [32, 64)
_R_WO = 2 * H              # attention output proj         rows [64, 96)
_R_WF2 = 3 * H             # FF second linear (FF, H)      rows [96, 224)
_R_VEC = 3 * H + FF        # 9 H-length vectors, one per row, starting at 224
# vec order: [b_fuse, g_fuse, be_fuse, b_o, g1, be1, b_f2, g2, be2]


def _ln(v, g, b):
    mu = jnp.mean(v, axis=-1, keepdims=True)
    var = jnp.mean((v - mu) ** 2, axis=-1, keepdims=True)
    return (v - mu) * jax.lax.rsqrt(var + LN_EPS) * g + b


def _nt_dot(a, b):
    # a:(M,D) x b:(N,D) -> (M,N); contraction on the last (lane) dim of both,
    # so no explicit transpose is materialized.
    return jax.lax.dot_general(a, b, (((1,), (1,)), ((), ())),
                               preferred_element_type=jnp.float32)


def _rows(ref, start, n):
    # static slice of a packed weight slab: free ref view + load
    return ref[pl.ds(start, n), :]


def score_kernel(qt_ref, qm_ref, dt_ref, dm_ref, pmr_ref, pmc_ref,
                 w32_ref, wqkv_ref, wff1_ref, wdec_ref, out_ref):
    f32 = jnp.float32

    # per-batch blocks (grid axis 0 = batch); bf16 tokens upcast right after load
    q_tok = qt_ref[0].astype(f32)      # (Lq, H)
    qm = qm_ref[0]                     # (1, Lq)   lane-dense
    d_tok = dt_ref[0].astype(f32)      # (P, Ld, H)
    dm = dm_ref[0]                     # (P, Ld)   lane-dense
    pm_row = pmr_ref[0]                # (1, P)
    pm_col = pmc_ref[0]                # (P, 1)

    # ---- _compute_sentence_embedding: masked mean pooling -------------------
    q_cnt = jnp.maximum(jnp.sum(qm, axis=-1, keepdims=True), 1.0)          # (1,1)
    q_embed = jnp.dot(qm, q_tok, preferred_element_type=f32)               # (1,H)
    q_embed = q_embed * pl.reciprocal(q_cnt, approx=True)
    d_cnt = jnp.maximum(jnp.sum(dm, axis=-1, keepdims=True), 1.0)          # (P,1)
    corpus = jnp.sum(d_tok * dm[:, :, None], axis=1)                       # (P,H)
    corpus = corpus * pl.reciprocal(d_cnt, approx=True)
    corpus = corpus * pm_col           # invalid profile slots -> 0 (sparse to_dense)

    # ---- _fuse_concat, algebraically: relu(corpus@Wc + q_embed@Wq + b) ------
    q_contrib = jnp.dot(q_embed, _rows(w32_ref, _R_WFQ, H),
                        preferred_element_type=f32)                        # (1,H)
    x = jnp.dot(corpus, _rows(w32_ref, _R_WFC, H), preferred_element_type=f32)
    x = x + q_contrib                                                      # broadcast over P rows
    x = jnp.maximum(x + _rows(w32_ref, _R_VEC + 0, 1), 0.0)
    # ---- fuse_norm -----------------------------------------------------------
    x = _ln(x, _rows(w32_ref, _R_VEC + 1, 1), _rows(w32_ref, _R_VEC + 2, 1))

    # ---- attention bias: key padding only (attention is per-batch) ----------
    bias = (pm_row - 1.0) * 1e30                                           # (1, P)

    # ---- doc_transformer: fused QKV projection ------------------------------
    qkv = jnp.dot(x, _rows(wqkv_ref, 0, H), preferred_element_type=f32)
    qkv = qkv + _rows(wqkv_ref, H, 1)                                      # (P, 3H)
    q = qkv[:, 0:H]
    k = qkv[:, H:2 * H]
    v = qkv[:, 2 * H:3 * H]

    # ---- multi-head attention via lane-masked contractions ------------------
    lane = jax.lax.broadcasted_iota(jnp.int32, (1, H), 1)                  # hoisted
    head_masks = [jnp.logical_and(lane >= h * HD, lane < (h + 1) * HD).astype(f32)
                  for h in range(NUM_HEADS)]                               # hoisted
    inv_scale = 1.0 / (HD ** 0.5)
    ctx = jnp.zeros_like(x)
    for m in head_masks:                                                   # static loop
        s = _nt_dot(q * m, k) * inv_scale + bias                           # (P,P)
        s = s - jnp.max(s, axis=-1, keepdims=True)
        e = jnp.exp(s)
        a = e / jnp.sum(e, axis=-1, keepdims=True)                         # exact recip
        # head-h output lands exactly on head-h lanes; sum over heads == concat
        ctx = ctx + jnp.dot(a, v * m, preferred_element_type=f32)

    attn = jnp.dot(ctx, _rows(w32_ref, _R_WO, H), preferred_element_type=f32)
    attn = attn + _rows(w32_ref, _R_VEC + 3, 1)
    x = _ln(x + attn, _rows(w32_ref, _R_VEC + 4, 1), _rows(w32_ref, _R_VEC + 5, 1))

    # ---- feed-forward block ---------------------------------------------------
    ff = jnp.dot(x, _rows(wff1_ref, 0, H), preferred_element_type=f32)
    ff = jnp.maximum(ff + _rows(wff1_ref, H, 1), 0.0)
    ff = jnp.dot(ff, _rows(w32_ref, _R_WF2, FF), preferred_element_type=f32)
    ff = ff + _rows(w32_ref, _R_VEC + 6, 1)
    x = _ln(x + ff, _rows(w32_ref, _R_VEC + 7, 1), _rows(w32_ref, _R_VEC + 8, 1))

    # ---- mlp_decoder: Linear(H->DEC)+ReLU+Linear(DEC->1)+Sigmoid, lane-dense -
    hdec = jnp.dot(x, _rows(wdec_ref, 0, H), preferred_element_type=f32)
    hdec = jnp.maximum(hdec + _rows(wdec_ref, H, 1), 0.0)                  # (P,DEC)
    logits = _nt_dot(_rows(wdec_ref, H + 1, 1), hdec)                      # (1,P)
    logits = logits + wdec_ref[pl.ds(H + 2, 1), pl.ds(0, 1)]               # + bd2
    out_ref[0] = jax.nn.sigmoid(logits) * pm_row                           # masked_fill


def pack_params(p):
    """Consolidate 24 small parameter tensors into 4 packed slabs."""
    slab32 = jnp.concatenate([
        p["w_fuse"][:H, :], p["w_fuse"][H:, :], p["wo"], p["wf2"],
        p["b_fuse"], p["g_fuse"], p["be_fuse"],
        p["bo"], p["g1"], p["be1"],
        p["bf2"], p["g2"], p["be2"],
    ], axis=0).astype(jnp.float32)                                         # (233, H)
    w_qkv = jnp.concatenate([
        jnp.concatenate([p["wq"], p["wk"], p["wv"]], axis=1),
        jnp.concatenate([p["bq"], p["bk"], p["bv"]], axis=1),
    ], axis=0).astype(jnp.float32)                                         # (H+1, 3H)
    w_ff1 = jnp.concatenate([p["wf1"], p["bf1"]], axis=0).astype(jnp.float32)  # (H+1, FF)
    bd2_row = jnp.pad(p["bd2"], ((0, 0), (0, DEC - 1)))
    w_dec = jnp.concatenate([p["wd1"], p["bd1"], p["wd2"], bd2_row],
                            axis=0).astype(jnp.float32)                    # (H+3, DEC)
    return slab32, w_qkv, w_ff1, w_dec


def score_model_forward(query_tok, query_mask, doc_tok, doc_mask, profile_mask, params):
    """query_tok:[B,Lq,H] query_mask:[B,Lq] doc_tok:[B,P,Ld,H] doc_mask:[B,P,Ld]
    profile_mask:[B,P] ({0,1} masks). Returns likelihoods [B,P]."""
    B, Lq, _ = query_tok.shape
    _, P, Ld, _ = doc_tok.shape

    # layout plumbing only: bf16 token streams, lane-dense masks, row/col profile mask
    qt = query_tok.astype(jnp.bfloat16)
    dt = doc_tok.astype(jnp.bfloat16)
    qm = query_mask.reshape(B, 1, Lq).astype(jnp.float32)
    dm = doc_mask.reshape(B, P, Ld).astype(jnp.float32)
    pm_row = profile_mask.reshape(B, 1, P).astype(jnp.float32)
    pm_col = profile_mask.reshape(B, P, 1).astype(jnp.float32)
    slab32, w_qkv, w_ff1, w_dec = pack_params(params)

    def _full(arr):  # untiled, VMEM-resident weight slab (same block every step)
        nd = arr.ndim
        return pl.BlockSpec(arr.shape, lambda b, _nd=nd: (0,) * _nd)

    out = pl.pallas_call(
        score_kernel,
        out_shape=jax.ShapeDtypeStruct((B, 1, P), jnp.float32),
        grid=(B,),
        in_specs=[
            pl.BlockSpec((1, Lq, H), lambda b: (b, 0, 0)),       # q_tok (bf16)
            pl.BlockSpec((1, 1, Lq), lambda b: (b, 0, 0)),       # q_mask
            pl.BlockSpec((1, P, Ld, H), lambda b: (b, 0, 0, 0)),  # d_tok (bf16)
            pl.BlockSpec((1, P, Ld), lambda b: (b, 0, 0)),       # d_mask
            pl.BlockSpec((1, 1, P), lambda b: (b, 0, 0)),        # profile mask (row)
            pl.BlockSpec((1, P, 1), lambda b: (b, 0, 0)),        # profile mask (col)
            _full(slab32), _full(w_qkv), _full(w_ff1), _full(w_dec),
        ],
        out_specs=pl.BlockSpec((1, 1, P), lambda b: (b, 0, 0)),
        compiler_params=pltpu.CompilerParams(
            dimension_semantics=("parallel",),        # batches independent -> megacore
            vmem_limit_bytes=64 * 1024 * 1024),       # above 16/32 MiB scoped defaults
    )(qt, qm, dt, dm, pm_row, pm_col, slab32, w_qkv, w_ff1, w_dec)
    return out.reshape(B, P)


# ---------------- pure-JAX reference (for a sanity check) -----------------------
def reference(query_tok, query_mask, doc_tok, doc_mask, pm, p):
    qe = jnp.einsum("bl,blh->bh", query_mask, query_tok) / jnp.maximum(
        query_mask.sum(-1, keepdims=True), 1.0)
    ce = jnp.einsum("bpl,bplh->bph", doc_mask, doc_tok) / jnp.maximum(
        doc_mask.sum(-1, keepdims=True), 1.0)
    ce = ce * pm[..., None]
    B, P, _ = ce.shape
    qb = jnp.broadcast_to(qe[:, None, :], (B, P, H))
    x = jnp.maximum(jnp.concatenate([qb, ce], -1) @ p["w_fuse"] + p["b_fuse"][0], 0.0)

    def ln(v, g, b):
        mu = v.mean(-1, keepdims=True)
        var = ((v - mu) ** 2).mean(-1, keepdims=True)
        return (v - mu) / jnp.sqrt(var + LN_EPS) * g[0] + b[0]

    x = ln(x, p["g_fuse"], p["be_fuse"])
    q = x @ p["wq"] + p["bq"][0]
    k = x @ p["wk"] + p["bk"][0]
    v = x @ p["wv"] + p["bv"][0]
    hd = H // NUM_HEADS
    qh = q.reshape(B, P, NUM_HEADS, hd)
    kh = k.reshape(B, P, NUM_HEADS, hd)
    vh = v.reshape(B, P, NUM_HEADS, hd)
    s = jnp.einsum("bqnd,bknd->bnqk", qh, kh) / hd ** 0.5
    s = s + ((pm - 1.0) * 1e30)[:, None, None, :]
    a = jax.nn.softmax(s, axis=-1)
    attn = jnp.einsum("bnqk,bknd->bqnd", a, vh).reshape(B, P, H)
    attn = attn @ p["wo"] + p["bo"][0]
    x = ln(x + attn, p["g1"], p["be1"])
    ff = jnp.maximum(x @ p["wf1"] + p["bf1"][0], 0.0) @ p["wf2"] + p["bf2"][0]
    x = ln(x + ff, p["g2"], p["be2"])
    h1 = jnp.maximum(x @ p["wd1"] + p["bd1"][0], 0.0)
    logits = jnp.sum(h1 * p["wd2"][0], axis=-1) + p["bd2"][0, 0]
    return jax.nn.sigmoid(logits) * pm


def init_params(key):
    ks = jax.random.split(key, 16)
    n = lambda k, shp, s=0.05: (jax.random.normal(k, shp, jnp.float32) * s)
    zeros = lambda shp: jnp.zeros(shp, jnp.float32)
    ones = lambda shp: jnp.ones(shp, jnp.float32)
    return {
        "w_fuse": n(ks[0], (2 * H, H)), "b_fuse": zeros((1, H)),
        "g_fuse": ones((1, H)), "be_fuse": zeros((1, H)),
        "wq": n(ks[1], (H, H)), "wk": n(ks[2], (H, H)), "wv": n(ks[3], (H, H)),
        "bq": zeros((1, H)), "bk": zeros((1, H)), "bv": zeros((1, H)),
        "wo": n(ks[4], (H, H)), "bo": zeros((1, H)),
        "g1": ones((1, H)), "be1": zeros((1, H)),
        "wf1": n(ks[5], (H, FF)), "bf1": zeros((1, FF)),
        "wf2": n(ks[6], (FF, H)), "bf2": zeros((1, H)),
        "g2": ones((1, H)), "be2": zeros((1, H)),
        "wd1": n(ks[7], (H, DEC)), "bd1": zeros((1, DEC)),
        "wd2": n(ks[8], (1, DEC)), "bd2": zeros((1, 1)),
    }


if __name__ == "__main__":
    B, P, Lq, Ld = 2, 8, 8, 8
    key = jax.random.PRNGKey(0)
    kq, kd, kp = jax.random.split(key, 3)

    # "encoder outputs" (last_hidden_state token embeddings) as synthetic inputs.
    # Quantize to bf16 once so kernel (bf16 streaming) and f32 reference see
    # identical token values.
    query_tok = jax.random.normal(kq, (B, Lq, H), jnp.float32)
    query_tok = query_tok.astype(jnp.bfloat16).astype(jnp.float32)
    doc_tok = jax.random.normal(kd, (B, P, Ld, H), jnp.float32)
    doc_tok = doc_tok.astype(jnp.bfloat16).astype(jnp.float32)

    # deterministic masks: some padded query tokens, some padded doc tokens,
    # and some invalid profile slots in batch 1
    query_mask = jnp.where(jnp.arange(Lq)[None, :] < jnp.array([[8], [6]]), 1.0, 0.0)
    profile_mask = jnp.where(jnp.arange(P)[None, :] < jnp.array([[8], [5]]), 1.0, 0.0)
    doc_mask = jnp.where(jnp.arange(Ld)[None, None, :] < 6, 1.0, 0.0)
    doc_mask = jnp.broadcast_to(doc_mask, (B, P, Ld)) * profile_mask[..., None]
    query_mask = query_mask.astype(jnp.float32)
    profile_mask = profile_mask.astype(jnp.float32)
    doc_mask = doc_mask.astype(jnp.float32)

    params = init_params(kp)

    likelihoods = score_model_forward(
        query_tok, query_mask, doc_tok, doc_mask, profile_mask, params)
    likelihoods = jax.block_until_ready(likelihoods)

    ref = reference(query_tok, query_mask, doc_tok, doc_mask, profile_mask, params)
    assert likelihoods.shape == (B, P)
    assert bool(jnp.all(jnp.isfinite(likelihoods)))
    assert bool(jnp.allclose(likelihoods, ref, atol=1e-2, rtol=1e-2))
    # TODO(synk): frozen HF encoder forward itself (and train-mode dropout) is
    # not reproduced in-kernel; token embeddings are taken as inputs.
    print("KERNEL_OK")
</pallas_src>

<mosaic_0001>
module attributes {stable_mosaic.version = 11 : i64} {
  func.func @score_kernel(%arg0: i32, %arg1: memref<1x8x32xbf16, #tpu.memory_space<vmem>>, %arg2: memref<1x1x8xf32, #tpu.memory_space<vmem>>, %arg3: memref<1x8x8x32xbf16, #tpu.memory_space<vmem>>, %arg4: memref<1x8x8xf32, #tpu.memory_space<vmem>>, %arg5: memref<1x1x8xf32, #tpu.memory_space<vmem>>, %arg6: memref<1x8x1xf32, #tpu.memory_space<vmem>>, %arg7: memref<233x32xf32, #tpu.memory_space<vmem>>, %arg8: memref<33x96xf32, #tpu.memory_space<vmem>>, %arg9: memref<33x128xf32, #tpu.memory_space<vmem>>, %arg10: memref<35x16xf32, #tpu.memory_space<vmem>>, %arg11: memref<1x1x8xf32, #tpu.memory_space<vmem>>) attributes {dimension_semantics = [#tpu.dimension_semantics<parallel>], iteration_bounds = array<i64: 2>, scalar_prefetch = 0 : i64, scratch_operands = 0 : i64, tpu.core_type = #tpu.core_type<tc>, window_params = [{transform_indices = @transform_0, window_bounds = array<i64: 1, 8, 32>}, {transform_indices = @transform_1, window_bounds = array<i64: 1, 1, 8>}, {transform_indices = @transform_2, window_bounds = array<i64: 1, 8, 8, 32>}, {transform_indices = @transform_3, window_bounds = array<i64: 1, 8, 8>}, {transform_indices = @transform_4, window_bounds = array<i64: 1, 1, 8>}, {transform_indices = @transform_5, window_bounds = array<i64: 1, 8, 1>}, {pipeline_mode = #tpu.pipeline_mode<synchronous>, transform_indices = @transform_6, window_bounds = array<i64: 233, 32>}, {pipeline_mode = #tpu.pipeline_mode<synchronous>, transform_indices = @transform_7, window_bounds = array<i64: 33, 96>}, {pipeline_mode = #tpu.pipeline_mode<synchronous>, transform_indices = @transform_8, window_bounds = array<i64: 33, 128>}, {pipeline_mode = #tpu.pipeline_mode<synchronous>, transform_indices = @transform_9, window_bounds = array<i64: 35, 16>}, {transform_indices = @transform_10, window_bounds = array<i64: 1, 1, 8>}]} {
    %c0 = arith.constant 0 : index
    %c0_0 = arith.constant 0 : index
    %c0_1 = arith.constant 0 : index
    %0 = vector.load %arg1[%c0, %c0_0, %c0_1] : memref<1x8x32xbf16, #tpu.memory_space<vmem>>, vector<1x8x32xbf16>
    %1 = vector.shape_cast %0 : vector<1x8x32xbf16> to vector<8x32xbf16>
    %2 = arith.extf %1 : vector<8x32xbf16> to vector<8x32xf32>
    %c0_2 = arith.constant 0 : index
    %c0_3 = arith.constant 0 : index
    %c0_4 = arith.constant 0 : index
    %3 = vector.load %arg2[%c0_2, %c0_3, %c0_4] : memref<1x1x8xf32, #tpu.memory_space<vmem>>, vector<1x1x8xf32>
    %4 = vector.shape_cast %3 : vector<1x1x8xf32> to vector<1x8xf32>
    %c0_5 = arith.constant 0 : index
    %c0_6 = arith.constant 0 : index
    %c0_7 = arith.constant 0 : index
    %c0_8 = arith.constant 0 : index
    %5 = vector.load %arg3[%c0_5, %c0_6, %c0_7, %c0_8] : memref<1x8x8x32xbf16, #tpu.memory_space<vmem>>, vector<1x8x8x32xbf16>
    %6 = vector.shape_cast %5 : vector<1x8x8x32xbf16> to vector<8x8x32xbf16>
    %7 = arith.extf %6 : vector<8x8x32xbf16> to vector<8x8x32xf32>
    %c0_9 = arith.constant 0 : index
    %c0_10 = arith.constant 0 : index
    %c0_11 = arith.constant 0 : index
    %8 = vector.load %arg4[%c0_9, %c0_10, %c0_11] : memref<1x8x8xf32, #tpu.memory_space<vmem>>, vector<1x8x8xf32>
    %9 = vector.shape_cast %8 : vector<1x8x8xf32> to vector<8x8xf32>
    %c0_12 = arith.constant 0 : index
    %c0_13 = arith.constant 0 : index
    %c0_14 = arith.constant 0 : index
    %10 = vector.load %arg5[%c0_12, %c0_13, %c0_14] : memref<1x1x8xf32, #tpu.memory_space<vmem>>, vector<1x1x8xf32>
    %11 = vector.shape_cast %10 : vector<1x1x8xf32> to vector<1x8xf32>
    %c0_15 = arith.constant 0 : index
    %c0_16 = arith.constant 0 : index
    %c0_17 = arith.constant 0 : index
    %12 = vector.load %arg6[%c0_15, %c0_16, %c0_17] : memref<1x8x1xf32, #tpu.memory_space<vmem>>, vector<1x8x1xf32>
    %13 = vector.shape_cast %12 : vector<1x8x1xf32> to vector<8x1xf32>
    %cst = arith.constant dense<0.000000e+00> : vector<1xf32>
    %14 = vector.multi_reduction <add>, %4, %cst [1] : vector<1x8xf32> to vector<1xf32>
    %15 = vector.shape_cast %14 : vector<1xf32> to vector<1x1xf32>
    %cst_18 = arith.constant 1.000000e+00 : f32
    %16 = vector.broadcast %cst_18 : f32 to vector<1x1xf32>
    %17 = arith.maximumf %15, %16 : vector<1x1xf32>
    %cst_19 = arith.constant dense<0.000000e+00> : vector<1x32xf32>
    %18 = tpu.matmul %4, %2, %cst_19 {dimension_numbers = #tpu.dot_dimension_numbers<[1], [0], [0], [1], [0, 0, 1, 1], [], []>} : vector<1x8xf32>, vector<8x32xf32>, vector<1x32xf32> -> vector<1x32xf32>
    %19 = tpu.reciprocal %17 {approx = true} : vector<1x1xf32> -> vector<1x1xf32>
    %20 = vector.broadcast %19 : vector<1x1xf32> to vector<1x32xf32>
    %21 = arith.mulf %18, %20 : vector<1x32xf32>
    %cst_20 = arith.constant dense<0.000000e+00> : vector<8xf32>
    %22 = vector.multi_reduction <add>, %9, %cst_20 [1] : vector<8x8xf32> to vector<8xf32>
    %23 = vector.shape_cast %22 : vector<8xf32> to vector<8x1xf32>
    %cst_21 = arith.constant 1.000000e+00 : f32
    %24 = vector.broadcast %cst_21 : f32 to vector<8x1xf32>
    %25 = arith.maximumf %23, %24 : vector<8x1xf32>
    %26 = vector.shape_cast %9 : vector<8x8xf32> to vector<8x8x1xf32>
    %27 = vector.broadcast %26 : vector<8x8x1xf32> to vector<8x8x32xf32>
    %28 = arith.mulf %7, %27 : vector<8x8x32xf32>
    %cst_22 = arith.constant dense<0.000000e+00> : vector<8x32xf32>
    %29 = vector.multi_reduction <add>, %28, %cst_22 [1] : vector<8x8x32xf32> to vector<8x32xf32>
    %30 = tpu.reciprocal %25 {approx = true} : vector<8x1xf32> -> vector<8x1xf32>
    %31 = vector.broadcast %30 : vector<8x1xf32> to vector<8x32xf32>
    %32 = arith.mulf %29, %31 : vector<8x32xf32>
    %33 = vector.broadcast %13 : vector<8x1xf32> to vector<8x32xf32>
    %34 = arith.mulf %32, %33 : vector<8x32xf32>
    %c0_23 = arith.constant 0 : index
    %c0_24 = arith.constant 0 : index
    %35 = vector.load %arg7[%c0_23, %c0_24] : memref<233x32xf32, #tpu.memory_space<vmem>>, vector<32x32xf32>
    %cst_25 = arith.constant dense<0.000000e+00> : vector<1x32xf32>
    %36 = tpu.matmul %21, %35, %cst_25 {dimension_numbers = #tpu.dot_dimension_numbers<[1], [0], [0], [1], [0, 0, 1, 1], [], []>} : vector<1x32xf32>, vector<32x32xf32>, vector<1x32xf32> -> vector<1x32xf32>
    %c32 = arith.constant 32 : index
    %c0_26 = arith.constant 0 : index
    %37 = vector.load %arg7[%c32, %c0_26] : memref<233x32xf32, #tpu.memory_space<vmem>>, vector<32x32xf32>
    %cst_27 = arith.constant dense<0.000000e+00> : vector<8x32xf32>
    %38 = tpu.matmul %34, %37, %cst_27 {dimension_numbers = #tpu.dot_dimension_numbers<[1], [0], [0], [1], [0, 0, 1, 1], [], []>} : vector<8x32xf32>, vector<32x32xf32>, vector<8x32xf32> -> vector<8x32xf32>
    %39 = vector.broadcast %36 : vector<1x32xf32> to vector<8x32xf32>
    %40 = arith.addf %38, %39 : vector<8x32xf32>
    %c224 = arith.constant 224 : index
    %c0_28 = arith.constant 0 : index
    %41 = vector.load %arg7[%c224, %c0_28] : memref<233x32xf32, #tpu.memory_space<vmem>>, vector<1x32xf32>
    %42 = vector.broadcast %41 : vector<1x32xf32> to vector<8x32xf32>
    %43 = arith.addf %40, %42 : vector<8x32xf32>
    %cst_29 = arith.constant 0.000000e+00 : f32
    %44 = vector.broadcast %cst_29 : f32 to vector<8x32xf32>
    %45 = arith.maximumf %43, %44 : vector<8x32xf32>
    %c225 = arith.constant 225 : index
    %c0_30 = arith.constant 0 : index
    %46 = vector.load %arg7[%c225, %c0_30] : memref<233x32xf32, #tpu.memory_space<vmem>>, vector<1x32xf32>
    %c226 = arith.constant 226 : index
    %c0_31 = arith.constant 0 : index
    %47 = vector.load %arg7[%c226, %c0_31] : memref<233x32xf32, #tpu.memory_space<vmem>>, vector<1x32xf32>
    %cst_32 = arith.constant dense<0.000000e+00> : vector<8xf32>
    %48 = vector.multi_reduction <add>, %45, %cst_32 [1] : vector<8x32xf32> to vector<8xf32>
    %49 = vector.shape_cast %48 : vector<8xf32> to vector<8x1xf32>
    %cst_33 = arith.constant 3.200000e+01 : f32
    %50 = vector.broadcast %cst_33 : f32 to vector<8x1xf32>
    %51 = arith.divf %49, %50 : vector<8x1xf32>
    %52 = vector.broadcast %51 : vector<8x1xf32> to vector<8x32xf32>
    %53 = arith.subf %45, %52 : vector<8x32xf32>
    %54 = arith.mulf %53, %53 : vector<8x32xf32>
    %cst_34 = arith.constant dense<0.000000e+00> : vector<8xf32>
    %55 = vector.multi_reduction <add>, %54, %cst_34 [1] : vector<8x32xf32> to vector<8xf32>
    %56 = vector.shape_cast %55 : vector<8xf32> to vector<8x1xf32>
    %cst_35 = arith.constant 3.200000e+01 : f32
    %57 = vector.broadcast %cst_35 : f32 to vector<8x1xf32>
    %58 = arith.divf %56, %57 : vector<8x1xf32>
    %59 = vector.broadcast %51 : vector<8x1xf32> to vector<8x32xf32>
    %60 = arith.subf %45, %59 : vector<8x32xf32>
    %cst_36 = arith.constant 9.99999974E-6 : f32
    %61 = vector.broadcast %cst_36 : f32 to vector<8x1xf32>
    %62 = arith.addf %58, %61 : vector<8x1xf32>
    %63 = math.rsqrt %62 : vector<8x1xf32>
    %64 = vector.broadcast %63 : vector<8x1xf32> to vector<8x32xf32>
    %65 = arith.mulf %60, %64 : vector<8x32xf32>
    %66 = vector.broadcast %46 : vector<1x32xf32> to vector<8x32xf32>
    %67 = arith.mulf %65, %66 : vector<8x32xf32>
    %68 = vector.broadcast %47 : vector<1x32xf32> to vector<8x32xf32>
    %69 = arith.addf %67, %68 : vector<8x32xf32>
    %cst_37 = arith.constant 1.000000e+00 : f32
    %70 = vector.broadcast %cst_37 : f32 to vector<1x8xf32>
    %71 = arith.subf %11, %70 : vector<1x8xf32>
    %cst_38 = arith.constant 1.000000e+30 : f32
    %72 = vector.broadcast %cst_38 : f32 to vector<1x8xf32>
    %73 = arith.mulf %71, %72 : vector<1x8xf32>
    %c0_39 = arith.constant 0 : index
    %c0_40 = arith.constant 0 : index
    %74 = vector.load %arg8[%c0_39, %c0_40] : memref<33x96xf32, #tpu.memory_space<vmem>>, vector<32x96xf32>
    %cst_41 = arith.constant dense<0.000000e+00> : vector<8x96xf32>
    %75 = tpu.matmul %69, %74, %cst_41 {dimension_numbers = #tpu.dot_dimension_numbers<[1], [0], [0], [1], [0, 0, 1, 1], [], []>} : vector<8x32xf32>, vector<32x96xf32>, vector<8x96xf32> -> vector<8x96xf32>
    %c32_42 = arith.constant 32 : index
    %c0_43 = arith.constant 0 : index
    %76 = vector.load %arg8[%c32_42, %c0_43] : memref<33x96xf32, #tpu.memory_space<vmem>>, vector<1x96xf32>
    %77 = vector.broadcast %76 : vector<1x96xf32> to vector<8x96xf32>
    %78 = arith.addf %75, %77 : vector<8x96xf32>
    %79 = vector.extract_strided_slice %78 {offsets = [0, 0], sizes = [8, 32], strides = [1, 1]} : vector<8x96xf32> to vector<8x32xf32>
    %80 = vector.extract_strided_slice %78 {offsets = [0, 32], sizes = [8, 32], strides = [1, 1]} : vector<8x96xf32> to vector<8x32xf32>
    %81 = vector.extract_strided_slice %78 {offsets = [0, 64], sizes = [8, 32], strides = [1, 1]} : vector<8x96xf32> to vector<8x32xf32>
    %82 = tpu.iota {dimensions = array<i32: 1>} : vector<1x32xi32>
    %c0_i32 = arith.constant 0 : i32
    %83 = vector.broadcast %c0_i32 : i32 to vector<1x32xi32>
    %84 = arith.cmpi sge, %82, %83 : vector<1x32xi32>
    %c8_i32 = arith.constant 8 : i32
    %85 = vector.broadcast %c8_i32 : i32 to vector<1x32xi32>
    %86 = arith.cmpi slt, %82, %85 : vector<1x32xi32>
    %87 = arith.andi %84, %86 : vector<1x32xi1>
    %88 = arith.extui %87 : vector<1x32xi1> to vector<1x32xi32>
    %89 = arith.sitofp %88 : vector<1x32xi32> to vector<1x32xf32>
    %c8_i32_44 = arith.constant 8 : i32
    %90 = vector.broadcast %c8_i32_44 : i32 to vector<1x32xi32>
    %91 = arith.cmpi sge, %82, %90 : vector<1x32xi32>
    %c16_i32 = arith.constant 16 : i32
    %92 = vector.broadcast %c16_i32 : i32 to vector<1x32xi32>
    %93 = arith.cmpi slt, %82, %92 : vector<1x32xi32>
    %94 = arith.andi %91, %93 : vector<1x32xi1>
    %95 = arith.extui %94 : vector<1x32xi1> to vector<1x32xi32>
    %96 = arith.sitofp %95 : vector<1x32xi32> to vector<1x32xf32>
    %c16_i32_45 = arith.constant 16 : i32
    %97 = vector.broadcast %c16_i32_45 : i32 to vector<1x32xi32>
    %98 = arith.cmpi sge, %82, %97 : vector<1x32xi32>
    %c24_i32 = arith.constant 24 : i32
    %99 = vector.broadcast %c24_i32 : i32 to vector<1x32xi32>
    %100 = arith.cmpi slt, %82, %99 : vector<1x32xi32>
    %101 = arith.andi %98, %100 : vector<1x32xi1>
    %102 = arith.extui %101 : vector<1x32xi1> to vector<1x32xi32>
    %103 = arith.sitofp %102 : vector<1x32xi32> to vector<1x32xf32>
    %c24_i32_46 = arith.constant 24 : i32
    %104 = vector.broadcast %c24_i32_46 : i32 to vector<1x32xi32>
    %105 = arith.cmpi sge, %82, %104 : vector<1x32xi32>
    %c32_i32 = arith.constant 32 : i32
    %106 = vector.broadcast %c32_i32 : i32 to vector<1x32xi32>
    %107 = arith.cmpi slt, %82, %106 : vector<1x32xi32>
    %108 = arith.andi %105, %107 : vector<1x32xi1>
    %109 = arith.extui %108 : vector<1x32xi1> to vector<1x32xi32>
    %110 = arith.sitofp %109 : vector<1x32xi32> to vector<1x32xf32>
    %cst_47 = arith.constant 0.000000e+00 : f32
    %111 = vector.broadcast %cst_47 : f32 to vector<8x32xf32>
    %112 = vector.broadcast %89 : vector<1x32xf32> to vector<8x32xf32>
    %113 = arith.mulf %79, %112 : vector<8x32xf32>
    %cst_48 = arith.constant dense<0.000000e+00> : vector<8x8xf32>
    %114 = tpu.matmul %113, %80, %cst_48 {dimension_numbers = #tpu.dot_dimension_numbers<[1], [1], [0], [0], [0, 0, 1, 0], [], []>} : vector<8x32xf32>, vector<8x32xf32>, vector<8x8xf32> -> vector<8x8xf32>
    %cst_49 = arith.constant 0.353553385 : f32
    %115 = vector.broadcast %cst_49 : f32 to vector<8x8xf32>
    %116 = arith.mulf %114, %115 : vector<8x8xf32>
    %117 = vector.broadcast %73 : vector<1x8xf32> to vector<8x8xf32>
    %118 = arith.addf %116, %117 : vector<8x8xf32>
    %cst_50 = arith.constant dense<0xFF800000> : vector<8xf32>
    %119 = vector.multi_reduction <maximumf>, %118, %cst_50 [1] : vector<8x8xf32> to vector<8xf32>
    %120 = vector.shape_cast %119 : vector<8xf32> to vector<8x1xf32>
    %121 = vector.broadcast %120 : vector<8x1xf32> to vector<8x8xf32>
    %122 = arith.subf %118, %121 : vector<8x8xf32>
    %123 = math.exp %122 : vector<8x8xf32>
    %cst_51 = arith.constant dense<0.000000e+00> : vector<8xf32>
    %124 = vector.multi_reduction <add>, %123, %cst_51 [1] : vector<8x8xf32> to vector<8xf32>
    %125 = vector.shape_cast %124 : vector<8xf32> to vector<8x1xf32>
    %126 = vector.broadcast %125 : vector<8x1xf32> to vector<8x8xf32>
    %127 = arith.divf %123, %126 : vector<8x8xf32>
    %128 = vector.broadcast %89 : vector<1x32xf32> to vector<8x32xf32>
    %129 = arith.mulf %81, %128 : vector<8x32xf32>
    %cst_52 = arith.constant dense<0.000000e+00> : vector<8x32xf32>
    %130 = tpu.matmul %127, %129, %cst_52 {dimension_numbers = #tpu.dot_dimension_numbers<[1], [0], [0], [1], [0, 0, 1, 1], [], []>} : vector<8x8xf32>, vector<8x32xf32>, vector<8x32xf32> -> vector<8x32xf32>
    %131 = arith.addf %111, %130 : vector<8x32xf32>
    %132 = vector.broadcast %96 : vector<1x32xf32> to vector<8x32xf32>
    %133 = arith.mulf %79, %132 : vector<8x32xf32>
    %cst_53 = arith.constant dense<0.000000e+00> : vector<8x8xf32>
    %134 = tpu.matmul %133, %80, %cst_53 {dimension_numbers = #tpu.dot_dimension_numbers<[1], [1], [0], [0], [0, 0, 1, 0], [], []>} : vector<8x32xf32>, vector<8x32xf32>, vector<8x8xf32> -> vector<8x8xf32>
    %cst_54 = arith.constant 0.353553385 : f32
    %135 = vector.broadcast %cst_54 : f32 to vector<8x8xf32>
    %136 = arith.mulf %134, %135 : vector<8x8xf32>
    %137 = vector.broadcast %73 : vector<1x8xf32> to vector<8x8xf32>
    %138 = arith.addf %136, %137 : vector<8x8xf32>
    %cst_55 = arith.constant dense<0xFF800000> : vector<8xf32>
    %139 = vector.multi_reduction <maximumf>, %138, %cst_55 [1] : vector<8x8xf32> to vector<8xf32>
    %140 = vector.shape_cast %139 : vector<8xf32> to vector<8x1xf32>
    %141 = vector.broadcast %140 : vector<8x1xf32> to vector<8x8xf32>
    %142 = arith.subf %138, %141 : vector<8x8xf32>
    %143 = math.exp %142 : vector<8x8xf32>
    %cst_56 = arith.constant dense<0.000000e+00> : vector<8xf32>
    %144 = vector.multi_reduction <add>, %143, %cst_56 [1] : vector<8x8xf32> to vector<8xf32>
    %145 = vector.shape_cast %144 : vector<8xf32> to vector<8x1xf32>
    %146 = vector.broadcast %145 : vector<8x1xf32> to vector<8x8xf32>
    %147 = arith.divf %143, %146 : vector<8x8xf32>
    %148 = vector.broadcast %96 : vector<1x32xf32> to vector<8x32xf32>
    %149 = arith.mulf %81, %148 : vector<8x32xf32>
    %cst_57 = arith.constant dense<0.000000e+00> : vector<8x32xf32>
    %150 = tpu.matmul %147, %149, %cst_57 {dimension_numbers = #tpu.dot_dimension_numbers<[1], [0], [0], [1], [0, 0, 1, 1], [], []>} : vector<8x8xf32>, vector<8x32xf32>, vector<8x32xf32> -> vector<8x32xf32>
    %151 = arith.addf %131, %150 : vector<8x32xf32>
    %152 = vector.broadcast %103 : vector<1x32xf32> to vector<8x32xf32>
    %153 = arith.mulf %79, %152 : vector<8x32xf32>
    %cst_58 = arith.constant dense<0.000000e+00> : vector<8x8xf32>
    %154 = tpu.matmul %153, %80, %cst_58 {dimension_numbers = #tpu.dot_dimension_numbers<[1], [1], [0], [0], [0, 0, 1, 0], [], []>} : vector<8x32xf32>, vector<8x32xf32>, vector<8x8xf32> -> vector<8x8xf32>
    %cst_59 = arith.constant 0.353553385 : f32
    %155 = vector.broadcast %cst_59 : f32 to vector<8x8xf32>
    %156 = arith.mulf %154, %155 : vector<8x8xf32>
    %157 = vector.broadcast %73 : vector<1x8xf32> to vector<8x8xf32>
    %158 = arith.addf %156, %157 : vector<8x8xf32>
    %cst_60 = arith.constant dense<0xFF800000> : vector<8xf32>
    %159 = vector.multi_reduction <maximumf>, %158, %cst_60 [1] : vector<8x8xf32> to vector<8xf32>
    %160 = vector.shape_cast %159 : vector<8xf32> to vector<8x1xf32>
    %161 = vector.broadcast %160 : vector<8x1xf32> to vector<8x8xf32>
    %162 = arith.subf %158, %161 : vector<8x8xf32>
    %163 = math.exp %162 : vector<8x8xf32>
    %cst_61 = arith.constant dense<0.000000e+00> : vector<8xf32>
    %164 = vector.multi_reduction <add>, %163, %cst_61 [1] : vector<8x8xf32> to vector<8xf32>
    %165 = vector.shape_cast %164 : vector<8xf32> to vector<8x1xf32>
    %166 = vector.broadcast %165 : vector<8x1xf32> to vector<8x8xf32>
    %167 = arith.divf %163, %166 : vector<8x8xf32>
    %168 = vector.broadcast %103 : vector<1x32xf32> to vector<8x32xf32>
    %169 = arith.mulf %81, %168 : vector<8x32xf32>
    %cst_62 = arith.constant dense<0.000000e+00> : vector<8x32xf32>
    %170 = tpu.matmul %167, %169, %cst_62 {dimension_numbers = #tpu.dot_dimension_numbers<[1], [0], [0], [1], [0, 0, 1, 1], [], []>} : vector<8x8xf32>, vector<8x32xf32>, vector<8x32xf32> -> vector<8x32xf32>
    %171 = arith.addf %151, %170 : vector<8x32xf32>
    %172 = vector.broadcast %110 : vector<1x32xf32> to vector<8x32xf32>
    %173 = arith.mulf %79, %172 : vector<8x32xf32>
    %cst_63 = arith.constant dense<0.000000e+00> : vector<8x8xf32>
    %174 = tpu.matmul %173, %80, %cst_63 {dimension_numbers = #tpu.dot_dimension_numbers<[1], [1], [0], [0], [0, 0, 1, 0], [], []>} : vector<8x32xf32>, vector<8x32xf32>, vector<8x8xf32> -> vector<8x8xf32>
    %cst_64 = arith.constant 0.353553385 : f32
    %175 = vector.broadcast %cst_64 : f32 to vector<8x8xf32>
    %176 = arith.mulf %174, %175 : vector<8x8xf32>
    %177 = vector.broadcast %73 : vector<1x8xf32> to vector<8x8xf32>
    %178 = arith.addf %176, %177 : vector<8x8xf32>
    %cst_65 = arith.constant dense<0xFF800000> : vector<8xf32>
    %179 = vector.multi_reduction <maximumf>, %178, %cst_65 [1] : vector<8x8xf32> to vector<8xf32>
    %180 = vector.shape_cast %179 : vector<8xf32> to vector<8x1xf32>
    %181 = vector.broadcast %180 : vector<8x1xf32> to vector<8x8xf32>
    %182 = arith.subf %178, %181 : vector<8x8xf32>
    %183 = math.exp %182 : vector<8x8xf32>
    %cst_66 = arith.constant dense<0.000000e+00> : vector<8xf32>
    %184 = vector.multi_reduction <add>, %183, %cst_66 [1] : vector<8x8xf32> to vector<8xf32>
    %185 = vector.shape_cast %184 : vector<8xf32> to vector<8x1xf32>
    %186 = vector.broadcast %185 : vector<8x1xf32> to vector<8x8xf32>
    %187 = arith.divf %183, %186 : vector<8x8xf32>
    %188 = vector.broadcast %110 : vector<1x32xf32> to vector<8x32xf32>
    %189 = arith.mulf %81, %188 : vector<8x32xf32>
    %cst_67 = arith.constant dense<0.000000e+00> : vector<8x32xf32>
    %190 = tpu.matmul %187, %189, %cst_67 {dimension_numbers = #tpu.dot_dimension_numbers<[1], [0], [0], [1], [0, 0, 1, 1], [], []>} : vector<8x8xf32>, vector<8x32xf32>, vector<8x32xf32> -> vector<8x32xf32>
    %191 = arith.addf %171, %190 : vector<8x32xf32>
    %c64 = arith.constant 64 : index
    %c0_68 = arith.constant 0 : index
    %192 = vector.load %arg7[%c64, %c0_68] : memref<233x32xf32, #tpu.memory_space<vmem>>, vector<32x32xf32>
    %cst_69 = arith.constant dense<0.000000e+00> : vector<8x32xf32>
    %193 = tpu.matmul %191, %192, %cst_69 {dimension_numbers = #tpu.dot_dimension_numbers<[1], [0], [0], [1], [0, 0, 1, 1], [], []>} : vector<8x32xf32>, vector<32x32xf32>, vector<8x32xf32> -> vector<8x32xf32>
    %c227 = arith.constant 227 : index
    %c0_70 = arith.constant 0 : index
    %194 = vector.load %arg7[%c227, %c0_70] : memref<233x32xf32, #tpu.memory_space<vmem>>, vector<1x32xf32>
    %195 = vector.broadcast %194 : vector<1x32xf32> to vector<8x32xf32>
    %196 = arith.addf %193, %195 : vector<8x32xf32>
    %197 = arith.addf %69, %196 : vector<8x32xf32>
    %c228 = arith.constant 228 : index
    %c0_71 = arith.constant 0 : index
    %198 = vector.load %arg7[%c228, %c0_71] : memref<233x32xf32, #tpu.memory_space<vmem>>, vector<1x32xf32>
    %c229 = arith.constant 229 : index
    %c0_72 = arith.constant 0 : index
    %199 = vector.load %arg7[%c229, %c0_72] : memref<233x32xf32, #tpu.memory_space<vmem>>, vector<1x32xf32>
    %cst_73 = arith.constant dense<0.000000e+00> : vector<8xf32>
    %200 = vector.multi_reduction <add>, %197, %cst_73 [1] : vector<8x32xf32> to vector<8xf32>
    %201 = vector.shape_cast %200 : vector<8xf32> to vector<8x1xf32>
    %cst_74 = arith.constant 3.200000e+01 : f32
    %202 = vector.broadcast %cst_74 : f32 to vector<8x1xf32>
    %203 = arith.divf %201, %202 : vector<8x1xf32>
    %204 = vector.broadcast %203 : vector<8x1xf32> to vector<8x32xf32>
    %205 = arith.subf %197, %204 : vector<8x32xf32>
    %206 = arith.mulf %205, %205 : vector<8x32xf32>
    %cst_75 = arith.constant dense<0.000000e+00> : vector<8xf32>
    %207 = vector.multi_reduction <add>, %206, %cst_75 [1] : vector<8x32xf32> to vector<8xf32>
    %208 = vector.shape_cast %207 : vector<8xf32> to vector<8x1xf32>
    %cst_76 = arith.constant 3.200000e+01 : f32
    %209 = vector.broadcast %cst_76 : f32 to vector<8x1xf32>
    %210 = arith.divf %208, %209 : vector<8x1xf32>
    %211 = vector.broadcast %203 : vector<8x1xf32> to vector<8x32xf32>
    %212 = arith.subf %197, %211 : vector<8x32xf32>
    %cst_77 = arith.constant 9.99999974E-6 : f32
    %213 = vector.broadcast %cst_77 : f32 to vector<8x1xf32>
    %214 = arith.addf %210, %213 : vector<8x1xf32>
    %215 = math.rsqrt %214 : vector<8x1xf32>
    %216 = vector.broadcast %215 : vector<8x1xf32> to vector<8x32xf32>
    %217 = arith.mulf %212, %216 : vector<8x32xf32>
    %218 = vector.broadcast %198 : vector<1x32xf32> to vector<8x32xf32>
    %219 = arith.mulf %217, %218 : vector<8x32xf32>
    %220 = vector.broadcast %199 : vector<1x32xf32> to vector<8x32xf32>
    %221 = arith.addf %219, %220 : vector<8x32xf32>
    %c0_78 = arith.constant 0 : index
    %c0_79 = arith.constant 0 : index
    %222 = vector.load %arg9[%c0_78, %c0_79] : memref<33x128xf32, #tpu.memory_space<vmem>>, vector<32x128xf32>
    %cst_80 = arith.constant dense<0.000000e+00> : vector<8x128xf32>
    %223 = tpu.matmul %221, %222, %cst_80 {dimension_numbers = #tpu.dot_dimension_numbers<[1], [0], [0], [1], [0, 0, 1, 1], [], []>} : vector<8x32xf32>, vector<32x128xf32>, vector<8x128xf32> -> vector<8x128xf32>
    %c32_81 = arith.constant 32 : index
    %c0_82 = arith.constant 0 : index
    %224 = vector.load %arg9[%c32_81, %c0_82] : memref<33x128xf32, #tpu.memory_space<vmem>>, vector<1x128xf32>
    %225 = vector.broadcast %224 : vector<1x128xf32> to vector<8x128xf32>
    %226 = arith.addf %223, %225 : vector<8x128xf32>
    %cst_83 = arith.constant 0.000000e+00 : f32
    %227 = vector.broadcast %cst_83 : f32 to vector<8x128xf32>
    %228 = arith.maximumf %226, %227 : vector<8x128xf32>
    %c96 = arith.constant 96 : index
    %c0_84 = arith.constant 0 : index
    %229 = vector.load %arg7[%c96, %c0_84] : memref<233x32xf32, #tpu.memory_space<vmem>>, vector<128x32xf32>
    %cst_85 = arith.constant dense<0.000000e+00> : vector<8x32xf32>
    %230 = tpu.matmul %228, %229, %cst_85 {dimension_numbers = #tpu.dot_dimension_numbers<[1], [0], [0], [1], [0, 0, 1, 1], [], []>} : vector<8x128xf32>, vector<128x32xf32>, vector<8x32xf32> -> vector<8x32xf32>
    %c230 = arith.constant 230 : index
    %c0_86 = arith.constant 0 : index
    %231 = vector.load %arg7[%c230, %c0_86] : memref<233x32xf32, #tpu.memory_space<vmem>>, vector<1x32xf32>
    %232 = vector.broadcast %231 : vector<1x32xf32> to vector<8x32xf32>
    %233 = arith.addf %230, %232 : vector<8x32xf32>
    %234 = arith.addf %221, %233 : vector<8x32xf32>
    %c231 = arith.constant 231 : index
    %c0_87 = arith.constant 0 : index
    %235 = vector.load %arg7[%c231, %c0_87] : memref<233x32xf32, #tpu.memory_space<vmem>>, vector<1x32xf32>
    %c232 = arith.constant 232 : index
    %c0_88 = arith.constant 0 : index
    %236 = vector.load %arg7[%c232, %c0_88] : memref<233x32xf32, #tpu.memory_space<vmem>>, vector<1x32xf32>
    %cst_89 = arith.constant dense<0.000000e+00> : vector<8xf32>
    %237 = vector.multi_reduction <add>, %234, %cst_89 [1] : vector<8x32xf32> to vector<8xf32>
    %238 = vector.shape_cast %237 : vector<8xf32> to vector<8x1xf32>
    %cst_90 = arith.constant 3.200000e+01 : f32
    %239 = vector.broadcast %cst_90 : f32 to vector<8x1xf32>
    %240 = arith.divf %238, %239 : vector<8x1xf32>
    %241 = vector.broadcast %240 : vector<8x1xf32> to vector<8x32xf32>
    %242 = arith.subf %234, %241 : vector<8x32xf32>
    %243 = arith.mulf %242, %242 : vector<8x32xf32>
    %cst_91 = arith.constant dense<0.000000e+00> : vector<8xf32>
    %244 = vector.multi_reduction <add>, %243, %cst_91 [1] : vector<8x32xf32> to vector<8xf32>
    %245 = vector.shape_cast %244 : vector<8xf32> to vector<8x1xf32>
    %cst_92 = arith.constant 3.200000e+01 : f32
    %246 = vector.broadcast %cst_92 : f32 to vector<8x1xf32>
    %247 = arith.divf %245, %246 : vector<8x1xf32>
    %248 = vector.broadcast %240 : vector<8x1xf32> to vector<8x32xf32>
    %249 = arith.subf %234, %248 : vector<8x32xf32>
    %cst_93 = arith.constant 9.99999974E-6 : f32
    %250 = vector.broadcast %cst_93 : f32 to vector<8x1xf32>
    %251 = arith.addf %247, %250 : vector<8x1xf32>
    %252 = math.rsqrt %251 : vector<8x1xf32>
    %253 = vector.broadcast %252 : vector<8x1xf32> to vector<8x32xf32>
    %254 = arith.mulf %249, %253 : vector<8x32xf32>
    %255 = vector.broadcast %235 : vector<1x32xf32> to vector<8x32xf32>
    %256 = arith.mulf %254, %255 : vector<8x32xf32>
    %257 = vector.broadcast %236 : vector<1x32xf32> to vector<8x32xf32>
    %258 = arith.addf %256, %257 : vector<8x32xf32>
    %c0_94 = arith.constant 0 : index
    %c0_95 = arith.constant 0 : index
    %259 = vector.load %arg10[%c0_94, %c0_95] : memref<35x16xf32, #tpu.memory_space<vmem>>, vector<32x16xf32>
    %cst_96 = arith.constant dense<0.000000e+00> : vector<8x16xf32>
    %260 = tpu.matmul %258, %259, %cst_96 {dimension_numbers = #tpu.dot_dimension_numbers<[1], [0], [0], [1], [0, 0, 1, 1], [], []>} : vector<8x32xf32>, vector<32x16xf32>, vector<8x16xf32> -> vector<8x16xf32>
    %c32_97 = arith.constant 32 : index
    %c0_98 = arith.constant 0 : index
    %261 = vector.load %arg10[%c32_97, %c0_98] : memref<35x16xf32, #tpu.memory_space<vmem>>, vector<1x16xf32>
    %262 = vector.broadcast %261 : vector<1x16xf32> to vector<8x16xf32>
    %263 = arith.addf %260, %262 : vector<8x16xf32>
    %cst_99 = arith.constant 0.000000e+00 : f32
    %264 = vector.broadcast %cst_99 : f32 to vector<8x16xf32>
    %265 = arith.maximumf %263, %264 : vector<8x16xf32>
    %c33 = arith.constant 33 : index
    %c0_100 = arith.constant 0 : index
    %266 = vector.load %arg10[%c33, %c0_100] : memref<35x16xf32, #tpu.memory_space<vmem>>, vector<1x16xf32>
    %cst_101 = arith.constant dense<0.000000e+00> : vector<1x8xf32>
    %267 = tpu.matmul %266, %265, %cst_101 {dimension_numbers = #tpu.dot_dimension_numbers<[1], [1], [0], [0], [0, 0, 1, 0], [], []>} : vector<1x16xf32>, vector<8x16xf32>, vector<1x8xf32> -> vector<1x8xf32>
    %c34 = arith.constant 34 : index
    %c0_102 = arith.constant 0 : index
    %268 = vector.load %arg10[%c34, %c0_102] : memref<35x16xf32, #tpu.memory_space<vmem>>, vector<1x1xf32>
    %269 = vector.broadcast %268 : vector<1x1xf32> to vector<1x8xf32>
    %270 = arith.addf %267, %269 : vector<1x8xf32>
    %271 = arith.negf %270 : vector<1x8xf32>
    %272 = math.exp %271 : vector<1x8xf32>
    %cst_103 = arith.constant 1.000000e+00 : f32
    %273 = vector.broadcast %cst_103 : f32 to vector<1x8xf32>
    %274 = arith.addf %273, %272 : vector<1x8xf32>
    %275 = arith.divf %273, %274 : vector<1x8xf32>
    %276 = arith.mulf %275, %11 : vector<1x8xf32>
    %c0_104 = arith.constant 0 : index
    %c0_105 = arith.constant 0 : index
    %c0_106 = arith.constant 0 : index
    %277 = vector.load %arg11[%c0_104, %c0_105, %c0_106] : memref<1x1x8xf32, #tpu.memory_space<vmem>>, vector<1x1x8xf32>
    %278 = vector.shape_cast %277 : vector<1x1x8xf32> to vector<1x8xf32>
    %279 = vector.shape_cast %276 : vector<1x8xf32> to vector<1x1x8xf32>
    tpu.vector_store %arg11[%c0_104, %c0_105, %c0_106], %279 {strides = array<i32>} : memref<1x1x8xf32, #tpu.memory_space<vmem>>, vector<1x1x8xf32>,
    return
  }
  func.func @transform_0(%arg0: i32) -> (i32, i32, i32) {
    %c0_i32 = arith.constant 0 : i32
    %c0_i32_0 = arith.constant 0 : i32
    %c0_i32_1 = arith.constant 0 : i32
    return %arg0, %c0_i32, %c0_i32_0 : i32, i32, i32
  }
  func.func @transform_1(%arg0: i32) -> (i32, i32, i32) {
    %c0_i32 = arith.constant 0 : i32
    %c0_i32_0 = arith.constant 0 : i32
    %c0_i32_1 = arith.constant 0 : i32
    return %arg0, %c0_i32, %c0_i32_0 : i32, i32, i32
  }
  func.func @transform_2(%arg0: i32) -> (i32, i32, i32, i32) {
    %c0_i32 = arith.constant 0 : i32
    %c0_i32_0 = arith.constant 0 : i32
    %c0_i32_1 = arith.constant 0 : i32
    %c0_i32_2 = arith.constant 0 : i32
    return %arg0, %c0_i32, %c0_i32_0, %c0_i32_1 : i32, i32, i32, i32
  }
  func.func @transform_3(%arg0: i32) -> (i32, i32, i32) {
    %c0_i32 = arith.constant 0 : i32
    %c0_i32_0 = arith.constant 0 : i32
    %c0_i32_1 = arith.constant 0 : i32
    return %arg0, %c0_i32, %c0_i32_0 : i32, i32, i32
  }
  func.func @transform_4(%arg0: i32) -> (i32, i32, i32) {
    %c0_i32 = arith.constant 0 : i32
    %c0_i32_0 = arith.constant 0 : i32
    %c0_i32_1 = arith.constant 0 : i32
    return %arg0, %c0_i32, %c0_i32_0 : i32, i32, i32
  }
  func.func @transform_5(%arg0: i32) -> (i32, i32, i32) {
    %c0_i32 = arith.constant 0 : i32
    %c0_i32_0 = arith.constant 0 : i32
    %c0_i32_1 = arith.constant 0 : i32
    return %arg0, %c0_i32, %c0_i32_0 : i32, i32, i32
  }
  func.func @transform_6(%arg0: i32) -> (i32, i32) {
    %c0_i32 = arith.constant 0 : i32
    %c0_i32_0 = arith.constant 0 : i32
    %c0_i32_1 = arith.constant 0 : i32
    return %c0_i32, %c0_i32_0 : i32, i32
  }
  func.func @transform_7(%arg0: i32) -> (i32, i32) {
    %c0_i32 = arith.constant 0 : i32
    %c0_i32_0 = arith.constant 0 : i32
    %c0_i32_1 = arith.constant 0 : i32
    return %c0_i32, %c0_i32_0 : i32, i32
  }
  func.func @transform_8(%arg0: i32) -> (i32, i32) {
    %c0_i32 = arith.constant 0 : i32
    %c0_i32_0 = arith.constant 0 : i32
    %c0_i32_1 = arith.constant 0 : i32
    return %c0_i32, %c0_i32_0 : i32, i32
  }
  func.func @transform_9(%arg0: i32) -> (i32, i32) {
    %c0_i32 = arith.constant 0 : i32
    %c0_i32_0 = arith.constant 0 : i32
    %c0_i32_1 = arith.constant 0 : i32
    return %c0_i32, %c0_i32_0 : i32, i32
  }
  func.func @transform_10(%arg0: i32) -> (i32, i32, i32) {
    %c0_i32 = arith.constant 0 : i32
    %c0_i32_0 = arith.constant 0 : i32
    %c0_i32_1 = arith.constant 0 : i32
    return %arg0, %c0_i32, %c0_i32_0 : i32, i32, i32
  }
}

</mosaic_0001>

<llo_original>
// kernel: tpu_custom_call.1
$region0: #{tpu_custom_call.1}
  #allocation0 [shape = 'u32[]', space=smem, size = 0x4, offset = 0x4, fixed_abs, tag = 'smem constant byte address 0x4 - core index']
  #allocation1 [shape = 'u32[144,128]{1,0:T(1,128)}', space=vmem, size = 0x12000, scoped, tag = 'internal scratch']
  %s0 = inlined_call_operand.hbm [shape: bf16[2,8,32], index: 0, kind: input, shape index: {}]
  %s1 = inlined_call_operand.hbm [shape: f32[2,1,8], index: 1, kind: input, shape index: {}]
  %s2 = inlined_call_operand.hbm [shape: bf16[2,8,8,32], index: 2, kind: input, shape index: {}]
  %s3 = inlined_call_operand.hbm [shape: f32[2,8,8], index: 3, kind: input, shape index: {}]
  %s4 = inlined_call_operand.hbm [shape: f32[2,1,8], index: 4, kind: input, shape index: {}]
  %s5 = inlined_call_operand.hbm [shape: f32[2,8,1], index: 5, kind: input, shape index: {}]
  %s6 = inlined_call_operand.hbm [shape: f32[233,32], index: 6, kind: input, shape index: {}]
  %s7 = inlined_call_operand.hbm [shape: f32[33,96], index: 7, kind: input, shape index: {}]
  %s8 = inlined_call_operand.hbm [shape: f32[33,128], index: 8, kind: input, shape index: {}]
  %s9 = inlined_call_operand.hbm [shape: f32[35,16], index: 9, kind: input, shape index: {}]
  %s10 = inlined_call_operand.hbm [shape: f32[2,1,8], index: 10, kind: output, shape index: {}]
  %s11 = sld [smem:[#allocation0]]
  $region113: #{tpu_custom_call.1} parent=0
    _
  %s13 = ssub.s32 1, %s11
  %s14 = scalar_select 0, %s13, %s11
  $region1: #{tpu_custom_call.1} parent=0
    #allocation2 [shape = 'u8[4096]{0}', space=vmem, size = 0x1000, scoped, tag = 'input window, operand 0']
    #allocation3 [shape = 's32[2]{0}', space=sflag, size = 0x8, scoped, tag = 'scoped memory for tpu_custom_call.1']
    #allocation4 [shape = 's32[2]{0}', space=sflag, size = 0x8, scoped, tag = 'scoped memory for tpu_custom_call.1']
    #allocation5 [shape = 'u8[1024]{0}', space=vmem, size = 0x400, scoped, tag = 'input window, operand 1']
    #allocation6 [shape = 's32[2]{0}', space=sflag, size = 0x8, scoped, tag = 'scoped memory for tpu_custom_call.1']
    #allocation7 [shape = 'u8[32768]{0}', space=vmem, size = 0x8000, scoped, tag = 'input window, operand 2']
    #allocation8 [shape = 'u8[8192]{0}', space=vmem, size = 0x2000, scoped, tag = 'input window, operand 3']
    #allocation9 [shape = 's32[2]{0}', space=sflag, size = 0x8, scoped, tag = 'scoped memory for tpu_custom_call.1']
    #allocation10 [shape = 'u8[1024]{0}', space=vmem, size = 0x400, scoped, tag = 'input window, operand 4']
    #allocation11 [shape = 'u8[8192]{0}', space=vmem, size = 0x2000, scoped, tag = 'input window, operand 5']
    #allocation12 [shape = 's32[2]{0}', space=sflag, size = 0x8, scoped, tag = 'scoped memory for tpu_custom_call.1']
    #allocation13 [shape = 'u8[122880]{0}', space=vmem, size = 0x1e000, scoped, tag = 'input window, operand 6, single buffered']
    #allocation14 [shape = 'u8[20480]{0}', space=vmem, size = 0x5000, scoped, tag = 'input window, operand 7, single buffered']
    #allocation15 [shape = 's32[1]{0}', space=sflag, size = 0x4, scoped, tag = 'scoped memory for tpu_custom_call.1']
    #allocation16 [shape = 'u8[20480]{0}', space=vmem, size = 0x5000, scoped, tag = 'input window, operand 8, single buffered']
    #allocation17 [shape = 'u8[20480]{0}', space=vmem, size = 0x5000, scoped, tag = 'input window, operand 9, single buffered']
    #allocation18 [shape = 's32[1]{0}', space=sflag, size = 0x4, scoped, tag = 'scoped memory for tpu_custom_call.1']
    #allocation19 [shape = 'u8[1024]{0}', space=vmem, size = 0x400, scoped, tag = 'output window, operand 0']
    %15 = vsyncpa [#allocation3], 0
    %s16 = scalar_lea.sflag [#allocation3], 1
    %17 = vsyncpa %s16, 0
    %18 = vsyncpa [#allocation6], 0
    %s19 = scalar_lea.sflag [#allocation6], 1
    %20 = vsyncpa %s19, 0
    %21 = vsyncpa [#allocation9], 0
    %s22 = scalar_lea.sflag [#allocation9], 1
    %23 = vsyncpa %s22, 0
    %24 = vsyncpa [#allocation12], 0
    %s25 = scalar_lea.sflag [#allocation12], 1
    %26 = vsyncpa %s25, 0
    %27 = vsyncpa [#allocation15], 0
    %28 = vsyncpa [#allocation18], 0
    %29 = vsyncpa [#allocation4], 0
    %s30 = scalar_lea.sflag [#allocation4], 1
    %31 = vsyncpa %s30, 0
    loop: start=0, step=1, limit=4
    $region2: #{tpu_custom_call.1} parent=1 // loop_pre_header
      _
    $region3: #{tpu_custom_call.1} parent=1 // loop_header
      %s33 = sphi 0, %s37
      %p34 = scmp.ge.s32.totalorder %s33, 4
      %s43 = sphi 0, %s45
      %s46 = sphi 0, %s43
      %s47 = sphi 0, %s46
      %s63 = sphi 0, %s47
      %s69 = sphi 0, %s71
      %s72 = sphi 0, %s69
      %s73 = sphi 0, %s72
      %s89 = sphi 0, %s73
      %s95 = sphi 0, %s97
      %s98 = sphi 0, %s95
      %s99 = sphi 0, %s98
      %s115 = sphi 0, %s99
      %s121 = sphi 0, %s123
      %s124 = sphi 0, %s121
      %s125 = sphi 0, %s124
      %s141 = sphi 0, %s125
      %s147 = sphi 0, %s149
      %s150 = sphi 0, %s147
      %s151 = sphi 0, %s150
      %s167 = sphi 0, %s151
      %s173 = sphi 0, %s175
      %s176 = sphi 0, %s173
      %s177 = sphi 0, %s176
      %s193 = sphi 0, %s177
      %s197 = sphi 0, %s197
      %s199 = sphi 0, %s197
      %s200 = sphi 0, %s199
      %s214 = sphi 0, %s200
      %s218 = sphi 0, %s218
      %s220 = sphi 0, %s218
      %s221 = sphi 0, %s220
      %s235 = sphi 0, %s221
      %s239 = sphi 0, %s239
      %s241 = sphi 0, %s239
      %s242 = sphi 0, %s241
      %s256 = sphi 0, %s242
      %s260 = sphi 0, %s260
      %s262 = sphi 0, %s260
      %s263 = sphi 0, %s262
      %s277 = sphi 0, %s263
      %s283 = sphi 0, %s285
      %s286 = sphi 0, %s283
      %s287 = sphi 0, %s286
      %s303 = sphi 0, %s287
    $region4: #{tpu_custom_call.1} parent=1 // loop_header_branch
      %36 = sbr.rel (%p34) target = $region8
    $region5: #{tpu_custom_call.1} parent=1 // loop_body
      %s38 = ssub.s32 %s33, 1
      %s39 = ssub.s32 %s33, 2
      %s40 = sadd.s32 %s33, 1
      %s41 = ssub.s32 %s33, %s40
      %p42 = scmp.eq.s32.totalorder %s41, 0
      %s44 = sadd.s32 %s43, 1
      %s45 = scalar_select %p42, %s43, %s44
      %p48 = pneg %p42
      %p49 = scmp.eq.s32.totalorder %s33, 1
      %p50 = por %p48, %p49
      %p51 = scmp.ne.s32.totalorder %s43, %s46
      %p52 = scmp.eq.s32.totalorder %s33, 0
      %p53 = por %p51, %p52
      %p54 = scmp.ne.s32.totalorder %s43, %s46
      %p55 = scmp.eq.s32.totalorder %s38, 1
      %p56 = por %p54, %p55
      %p57 = scmp.ne.s32.totalorder %s46, %s47
      %p58 = scmp.eq.s32.totalorder %s38, 0
      %p59 = por %p57, %p58
      %p60 = scmp.ne.s32.totalorder %s46, %s47
      %p61 = scmp.eq.s32.totalorder %s39, 1
      %p62 = por %p60, %p61
      %p64 = scmp.ne.s32.totalorder %s47, %s63
      %p65 = scmp.eq.s32.totalorder %s39, 0
      %p66 = por %p64, %p65
      %s67 = ssub.s32 %s33, %s40
      %p68 = scmp.eq.s32.totalorder %s67, 0
      %s70 = sadd.s32 %s69, 1
      %s71 = scalar_select %p68, %s69, %s70
      %p74 = pneg %p68
      %p75 = scmp.eq.s32.totalorder %s33, 1
      %p76 = por %p74, %p75
      %p77 = scmp.ne.s32.totalorder %s69, %s72
      %p78 = scmp.eq.s32.totalorder %s33, 0
      %p79 = por %p77, %p78
      %p80 = scmp.ne.s32.totalorder %s69, %s72
      %p81 = scmp.eq.s32.totalorder %s38, 1
      %p82 = por %p80, %p81
      %p83 = scmp.ne.s32.totalorder %s72, %s73
      %p84 = scmp.eq.s32.totalorder %s38, 0
      %p85 = por %p83, %p84
      %p86 = scmp.ne.s32.totalorder %s72, %s73
      %p87 = scmp.eq.s32.totalorder %s39, 1
      %p88 = por %p86, %p87
      %p90 = scmp.ne.s32.totalorder %s73, %s89
      %p91 = scmp.eq.s32.totalorder %s39, 0
      %p92 = por %p90, %p91
      %s93 = ssub.s32 %s33, %s40
      %p94 = scmp.eq.s32.totalorder %s93, 0
      %s96 = sadd.s32 %s95, 1
      %s97 = scalar_select %p94, %s95, %s96
      %p100 = pneg %p94
      %p101 = scmp.eq.s32.totalorder %s33, 1
      %p102 = por %p100, %p101
      %p103 = scmp.ne.s32.totalorder %s95, %s98
      %p104 = scmp.eq.s32.totalorder %s33, 0
      %p105 = por %p103, %p104
      %p106 = scmp.ne.s32.totalorder %s95, %s98
      %p107 = scmp.eq.s32.totalorder %s38, 1
      %p108 = por %p106, %p107
      %p109 = scmp.ne.s32.totalorder %s98, %s99
      %p110 = scmp.eq.s32.totalorder %s38, 0
      %p111 = por %p109, %p110
      %p112 = scmp.ne.s32.totalorder %s98, %s99
      %p113 = scmp.eq.s32.totalorder %s39, 1
      %p114 = por %p112, %p113
      %p116 = scmp.ne.s32.totalorder %s99, %s115
      %p117 = scmp.eq.s32.totalorder %s39, 0
      %p118 = por %p116, %p117
      %s119 = ssub.s32 %s33, %s40
      %p120 = scmp.eq.s32.totalorder %s119, 0
      %s122 = sadd.s32 %s121, 1
      %s123 = scalar_select %p120, %s121, %s122
      %p126 = pneg %p120
      %p127 = scmp.eq.s32.totalorder %s33, 1
      %p128 = por %p126, %p127
      %p129 = scmp.ne.s32.totalorder %s121, %s124
      %p130 = scmp.eq.s32.totalorder %s33, 0
      %p131 = por %p129, %p130
      %p132 = scmp.ne.s32.totalorder %s121, %s124
      %p133 = scmp.eq.s32.totalorder %s38, 1
      %p134 = por %p132, %p133
      %p135 = scmp.ne.s32.totalorder %s124, %s125
      %p136 = scmp.eq.s32.totalorder %s38, 0
      %p137 = por %p135, %p136
      %p138 = scmp.ne.s32.totalorder %s124, %s125
      %p139 = scmp.eq.s32.totalorder %s39, 1
      %p140 = por %p138, %p139
      %p142 = scmp.ne.s32.totalorder %s125, %s141
      %p143 = scmp.eq.s32.totalorder %s39, 0
      %p144 = por %p142, %p143
      %s145 = ssub.s32 %s33, %s40
      %p146 = scmp.eq.s32.totalorder %s145, 0
      %s148 = sadd.s32 %s147, 1
      %s149 = scalar_select %p146, %s147, %s148
      %p152 = pneg %p146
      %p153 = scmp.eq.s32.totalorder %s33, 1
      %p154 = por %p152, %p153
      %p155 = scmp.ne.s32.totalorder %s147, %s150
      %p156 = scmp.eq.s32.totalorder %s33, 0
      %p157 = por %p155, %p156
      %p158 = scmp.ne.s32.totalorder %s147, %s150
      %p159 = scmp.eq.s32.totalorder %s38, 1
      %p160 = por %p158, %p159
      %p161 = scmp.ne.s32.totalorder %s150, %s151
      %p162 = scmp.eq.s32.totalorder %s38, 0
      %p163 = por %p161, %p162
      %p164 = scmp.ne.s32.totalorder %s150, %s151
      %p165 = scmp.eq.s32.totalorder %s39, 1
      %p166 = por %p164, %p165
      %p168 = scmp.ne.s32.totalorder %s151, %s167
      %p169 = scmp.eq.s32.totalorder %s39, 0
      %p170 = por %p168, %p169
      %s171 = ssub.s32 %s33, %s40
      %p172 = scmp.eq.s32.totalorder %s171, 0
      %s174 = sadd.s32 %s173, 1
      %s175 = scalar_select %p172, %s173, %s174
      %p178 = pneg %p172
      %p179 = scmp.eq.s32.totalorder %s33, 1
      %p180 = por %p178, %p179
      %p181 = scmp.ne.s32.totalorder %s173, %s176
      %p182 = scmp.eq.s32.totalorder %s33, 0
      %p183 = por %p181, %p182
      %p184 = scmp.ne.s32.totalorder %s173, %s176
      %p185 = scmp.eq.s32.totalorder %s38, 1
      %p186 = por %p184, %p185
      %p187 = scmp.ne.s32.totalorder %s176, %s177
      %p188 = scmp.eq.s32.totalorder %s38, 0
      %p189 = por %p187, %p188
      %p190 = scmp.ne.s32.totalorder %s176, %s177
      %p191 = scmp.eq.s32.totalorder %s39, 1
      %p192 = por %p190, %p191
      %p194 = scmp.ne.s32.totalorder %s177, %s193
      %p195 = scmp.eq.s32.totalorder %s39, 0
      %p196 = por %p194, %p195
      %s198 = sadd.s32 %s197, 1
      %p201 = scmp.eq.s32.totalorder %s33, 1
      %p202 = scmp.ne.s32.totalorder %s197, %s199
      %p203 = scmp.eq.s32.totalorder %s33, 0
      %p204 = por %p202, %p203
      %p205 = scmp.ne.s32.totalorder %s197, %s199
      %p206 = scmp.eq.s32.totalorder %s38, 1
      %p207 = por %p205, %p206
      %p208 = scmp.ne.s32.totalorder %s199, %s200
      %p209 = scmp.eq.s32.totalorder %s38, 0
      %p210 = por %p208, %p209
      %p211 = scmp.ne.s32.totalorder %s199, %s200
      %p212 = scmp.eq.s32.totalorder %s39, 1
      %p213 = por %p211, %p212
      %p215 = scmp.ne.s32.totalorder %s200, %s214
      %p216 = scmp.eq.s32.totalorder %s39, 0
      %p217 = por %p215, %p216
      %s219 = sadd.s32 %s218, 1
      %p222 = scmp.eq.s32.totalorder %s33, 1
      %p223 = scmp.ne.s32.totalorder %s218, %s220
      %p224 = scmp.eq.s32.totalorder %s33, 0
      %p225 = por %p223, %p224
      %p226 = scmp.ne.s32.totalorder %s218, %s220
      %p227 = scmp.eq.s32.totalorder %s38, 1
      %p228 = por %p226, %p227
      %p229 = scmp.ne.s32.totalorder %s220, %s221
      %p230 = scmp.eq.s32.totalorder %s38, 0
      %p231 = por %p229, %p230
      %p232 = scmp.ne.s32.totalorder %s220, %s221
      %p233 = scmp.eq.s32.totalorder %s39, 1
      %p234 = por %p232, %p233
      %p236 = scmp.ne.s32.totalorder %s221, %s235
      %p237 = scmp.eq.s32.totalorder %s39, 0
      %p238 = por %p236, %p237
      %s240 = sadd.s32 %s239, 1
      %p243 = scmp.eq.s32.totalorder %s33, 1
      %p244 = scmp.ne.s32.totalorder %s239, %s241
      %p245 = scmp.eq.s32.totalorder %s33, 0
      %p246 = por %p244, %p245
      %p247 = scmp.ne.s32.totalorder %s239, %s241
      %p248 = scmp.eq.s32.totalorder %s38, 1
      %p249 = por %p247, %p248
      %p250 = scmp.ne.s32.totalorder %s241, %s242
      %p251 = scmp.eq.s32.totalorder %s38, 0
      %p252 = por %p250, %p251
      %p253 = scmp.ne.s32.totalorder %s241, %s242
      %p254 = scmp.eq.s32.totalorder %s39, 1
      %p255 = por %p253, %p254
      %p257 = scmp.ne.s32.totalorder %s242, %s256
      %p258 = scmp.eq.s32.totalorder %s39, 0
      %p259 = por %p257, %p258
      %s261 = sadd.s32 %s260, 1
      %p264 = scmp.eq.s32.totalorder %s33, 1
      %p265 = scmp.ne.s32.totalorder %s260, %s262
      %p266 = scmp.eq.s32.totalorder %s33, 0
      %p267 = por %p265, %p266
      %p268 = scmp.ne.s32.totalorder %s260, %s262
      %p269 = scmp.eq.s32.totalorder %s38, 1
      %p270 = por %p268, %p269
      %p271 = scmp.ne.s32.totalorder %s262, %s263
      %p272 = scmp.eq.s32.totalorder %s38, 0
      %p273 = por %p271, %p272
      %p274 = scmp.ne.s32.totalorder %s262, %s263
      %p275 = scmp.eq.s32.totalorder %s39, 1
      %p276 = por %p274, %p275
      %p278 = scmp.ne.s32.totalorder %s263, %s277
      %p279 = scmp.eq.s32.totalorder %s39, 0
      %p280 = por %p278, %p279
      %s281 = ssub.s32 %s33, %s40
      %p282 = scmp.eq.s32.totalorder %s281, 0
      %s284 = sadd.s32 %s283, 1
      %s285 = scalar_select %p282, %s283, %s284
      %p288 = pneg %p282
      %p289 = scmp.eq.s32.totalorder %s33, 1
      %p290 = por %p288, %p289
      %p291 = scmp.ne.s32.totalorder %s283, %s286
      %p292 = scmp.eq.s32.totalorder %s33, 0
      %p293 = por %p291, %p292
      %p294 = scmp.ne.s32.totalorder %s283, %s286
      %p295 = scmp.eq.s32.totalorder %s38, 1
      %p296 = por %p294, %p295
      %p297 = scmp.ne.s32.totalorder %s286, %s287
      %p298 = scmp.eq.s32.totalorder %s38, 0
      %p299 = por %p297, %p298
      %p300 = scmp.ne.s32.totalorder %s286, %s287
      %p301 = scmp.eq.s32.totalorder %s39, 1
      %p302 = por %p300, %p301
      %p304 = scmp.ne.s32.totalorder %s287, %s303
      %p305 = scmp.eq.s32.totalorder %s39, 0
      %p306 = por %p304, %p305
      %p307 = scmp.le.s32.totalorder 1, %s33
      %p308 = scmp.lt.s32.totalorder %s33, 3
      %p309 = pnand %p307, %p308
      %p310 = pneg %p309
      // Predicated region
      $region9: #{tpu_custom_call.1} parent=5 // pred_check
        _
      $region10: #{tpu_custom_call.1} parent=5 // pred_check_branch
        %312 = sbr.rel (%p309) target = $region12
      $region11: #{tpu_custom_call.1} parent=5 // pred_region
        %s313 = ssub.s32 %s33, 1
        // Predicated region
        $region13: #{tpu_custom_call.1} parent=11 // pred_check
          %p314 = pneg %p210
        $region14: #{tpu_custom_call.1} parent=11 // pred_check_branch
          %316 = sbr.rel (%p314) target = $region16
        $region15: #{tpu_custom_call.1} parent=11 // pred_region
          %s318 = ssub.s32 3840, 3840
          %319 = vsyncadd [#allocation12], %s318
          %s320 = sshll.u32 [#allocation13], 4
          %s321 = int_to_ptr.vmem [resolvable:$true] %s320
          %326 = dma.hbm_to_vmem [thread:$0]  %s6, 3840, %s321, [#allocation12], 128, 128, 8
        $region16: #{tpu_custom_call.1} parent=11 // pred_fallthru
          _
        // Predicated region
        $region17: #{tpu_custom_call.1} parent=11 // pred_check
          %p327 = pneg %p231
        $region18: #{tpu_custom_call.1} parent=11 // pred_check_branch
          %329 = sbr.rel (%p327) target = $region20
        $region19: #{tpu_custom_call.1} parent=11 // pred_region
          %s331 = ssub.s32 640, 640
          %332 = vsyncadd [#allocation15], %s331
          %s333 = sshll.u32 [#allocation14], 4
          %s334 = int_to_ptr.vmem [resolvable:$true] %s333
          %339 = dma.hbm_to_vmem [thread:$0]  %s7, 640, %s334, [#allocation15], 128, 128, 8
        $region20: #{tpu_custom_call.1} parent=11 // pred_fallthru
          _
        // Predicated region
        $region21: #{tpu_custom_call.1} parent=11 // pred_check
          %p340 = pneg %p252
        $region22: #{tpu_custom_call.1} parent=11 // pred_check_branch
          %342 = sbr.rel (%p340) target = $region24
        $region23: #{tpu_custom_call.1} parent=11 // pred_region
          %s344 = ssub.s32 640, 640
          %345 = vsyncadd [#allocation15], %s344
          %s346 = sshll.u32 [#allocation16], 4
          %s347 = int_to_ptr.vmem [resolvable:$true] %s346
          %352 = dma.hbm_to_vmem [thread:$0]  %s8, 640, %s347, [#allocation15], 128, 128, 8
        $region24: #{tpu_custom_call.1} parent=11 // pred_fallthru
          _
        // Predicated region
        $region25: #{tpu_custom_call.1} parent=11 // pred_check
          %p353 = pneg %p273
        $region26: #{tpu_custom_call.1} parent=11 // pred_check_branch
          %355 = sbr.rel (%p353) target = $region28
        $region27: #{tpu_custom_call.1} parent=11 // pred_region
          %s357 = ssub.s32 640, 640
          %358 = vsyncadd [#allocation18], %s357
          %s359 = sshll.u32 [#allocation17], 4
          %s360 = int_to_ptr.vmem [resolvable:$true] %s359
          %365 = dma.hbm_to_vmem [thread:$0]  %s9, 640, %s360, [#allocation18], 128, 128, 8
        $region28: #{tpu_custom_call.1} parent=11 // pred_fallthru
          _
      $region12: #{tpu_custom_call.1} parent=5 // pred_fallthru
        _
      %p366 = scmp.lt.s32.totalorder %s33, 2
      // Predicated region
      $region29: #{tpu_custom_call.1} parent=5 // pred_check
        %p367 = pneg %p366
      $region30: #{tpu_custom_call.1} parent=5 // pred_check_branch
        %369 = sbr.rel (%p367) target = $region32
      $region31: #{tpu_custom_call.1} parent=5 // pred_region
        // Predicated region
        $region33: #{tpu_custom_call.1} parent=31 // pred_check
          %p370 = pneg %p53
        $region34: #{tpu_custom_call.1} parent=31 // pred_check_branch
          %372 = sbr.rel (%p370) target = $region36
        $region35: #{tpu_custom_call.1} parent=31 // pred_region
          %s373 = sand.u32 %s43, 1
          %s374 = scalar_lea.sflag [#allocation3], %s373
          %s375 = sand.u32 %s43, 1
          %s376 = smul.addr %s375, 4
          %s377 = scalar_lea.vmem [#allocation2], %s376
          %s379 = ssub.s32 64, 64
          %380 = vsyncadd %s374, %s379
          %s381 = smul.addr %s33, 64
          %s382 = scalar_lea.hbm %s0, %s381
          %s384 = sshll.u32 %s377, 4
          %s385 = int_to_ptr.vmem [resolvable:$true] %s384
          %387 = dma.hbm_to_vmem [thread:$0]  %s382, 64, %s385, %s374
        $region36: #{tpu_custom_call.1} parent=31 // pred_fallthru
          _
        // Predicated region
        $region37: #{tpu_custom_call.1} parent=31 // pred_check
          %p388 = pneg %p79
        $region38: #{tpu_custom_call.1} parent=31 // pred_check_branch
          %390 = sbr.rel (%p388) target = $region40
        $region39: #{tpu_custom_call.1} parent=31 // pred_region
          %s391 = sand.u32 %s33, 1
          %s392 = scalar_lea.sflag [#allocation6], %s391
          %s393 = sand.u32 %s69, 1
          %s394 = scalar_lea.vmem [#allocation5], %s393
          %s396 = ssub.s32 16, 16
          %397 = vsyncadd %s392, %s396
          %s398 = smul.addr %s33, 16
          %s399 = scalar_lea.hbm %s1, %s398
          %s401 = sshll.u32 %s394, 4
          %s402 = int_to_ptr.vmem [resolvable:$true] %s401
          %404 = dma.hbm_to_vmem [thread:$0]  %s399, 16, %s402, %s392
        $region40: #{tpu_custom_call.1} parent=31 // pred_fallthru
          _
        // Predicated region
        $region41: #{tpu_custom_call.1} parent=31 // pred_check
          %p405 = pneg %p105
        $region42: #{tpu_custom_call.1} parent=31 // pred_check_branch
          %407 = sbr.rel (%p405) target = $region44
        $region43: #{tpu_custom_call.1} parent=31 // pred_region
          %s408 = sand.u32 %s33, 1
          %s409 = scalar_lea.sflag [#allocation6], %s408
          %s410 = sand.u32 %s95, 1
          %s411 = smul.addr %s410, 32
          %s412 = scalar_lea.vmem [#allocation7], %s411
          %s414 = ssub.s32 512, 512
          %415 = vsyncadd %s409, %s414
          %s416 = smul.addr %s33, 8
          %s417 = smul.addr %s416, 64
          %s418 = scalar_lea.hbm %s2, %s417
          %s419 = sshll.u32 %s412, 4
          %s420 = int_to_ptr.vmem [resolvable:$true] %s419
          %425 = dma.hbm_to_vmem [thread:$0]  %s418, 512, %s420, %s409, 64, 64, 4
        $region44: #{tpu_custom_call.1} parent=31 // pred_fallthru
          _
        // Predicated region
        $region45: #{tpu_custom_call.1} parent=31 // pred_check
          %p426 = pneg %p131
        $region46: #{tpu_custom_call.1} parent=31 // pred_check_branch
          %428 = sbr.rel (%p426) target = $region48
        $region47: #{tpu_custom_call.1} parent=31 // pred_region
          %s429 = sand.u32 %s33, 1
          %s430 = scalar_lea.sflag [#allocation9], %s429
          %s431 = sand.u32 %s121, 1
          %s432 = smul.addr %s431, 8
          %s433 = scalar_lea.vmem [#allocation8], %s432
          %s435 = ssub.s32 128, 128
          %436 = vsyncadd %s430, %s435
          %s437 = smul.addr %s33, 128
          %s438 = scalar_lea.hbm %s3, %s437
          %s440 = sshll.u32 %s433, 4
          %s441 = int_to_ptr.vmem [resolvable:$true] %s440
          %443 = dma.hbm_to_vmem [thread:$0]  %s438, 128, %s441, %s430
        $region48: #{tpu_custom_call.1} parent=31 // pred_fallthru
          _
        // Predicated region
        $region49: #{tpu_custom_call.1} parent=31 // pred_check
          %p444 = pneg %p157
        $region50: #{tpu_custom_call.1} parent=31 // pred_check_branch
          %446 = sbr.rel (%p444) target = $region52
        $region51: #{tpu_custom_call.1} parent=31 // pred_region
          %s447 = sand.u32 %s33, 1
          %s448 = scalar_lea.sflag [#allocation9], %s447
          %s449 = sand.u32 %s147, 1
          %s450 = scalar_lea.vmem [#allocation10], %s449
          %s452 = ssub.s32 16, 16
          %453 = vsyncadd %s448, %s452
          %s454 = smul.addr %s33, 16
          %s455 = scalar_lea.hbm %s4, %s454
          %s457 = sshll.u32 %s450, 4
          %s458 = int_to_ptr.vmem [resolvable:$true] %s457
          %460 = dma.hbm_to_vmem [thread:$0]  %s455, 16, %s458, %s448
        $region52: #{tpu_custom_call.1} parent=31 // pred_fallthru
          _
        // Predicated region
        $region53: #{tpu_custom_call.1} parent=31 // pred_check
          %p461 = pneg %p183
        $region54: #{tpu_custom_call.1} parent=31 // pred_check_branch
          %463 = sbr.rel (%p461) target = $region56
        $region55: #{tpu_custom_call.1} parent=31 // pred_region
          %s464 = sand.u32 %s33, 1
          %s465 = scalar_lea.sflag [#allocation12], %s464
          %s466 = sand.u32 %s173, 1
          %s467 = smul.addr %s466, 8
          %s468 = scalar_lea.vmem [#allocation11], %s467
          %s470 = ssub.s32 128, 128
          %471 = vsyncadd %s465, %s470
          %s472 = smul.addr %s33, 128
          %s473 = scalar_lea.hbm %s5, %s472
          %s475 = sshll.u32 %s468, 4
          %s476 = int_to_ptr.vmem [resolvable:$true] %s475
          %478 = dma.hbm_to_vmem [thread:$0]  %s473, 128, %s476, %s465
        $region56: #{tpu_custom_call.1} parent=31 // pred_fallthru
          _
      $region32: #{tpu_custom_call.1} parent=5 // pred_fallthru
        _
      %p479 = scmp.le.s32.totalorder 1, %s33
      %p480 = scmp.lt.s32.totalorder %s33, 3
      %p481 = pnand %p479, %p480
      %p482 = pneg %p481
      // Predicated region
      $region57: #{tpu_custom_call.1} parent=5 // pred_check
        _
      $region58: #{tpu_custom_call.1} parent=5 // pred_check_branch
        %484 = sbr.rel (%p481) target = $region60
      $region59: #{tpu_custom_call.1} parent=5 // pred_region
        %s485 = ssub.s32 %s33, 1
        %s486 = sand.u32 %s46, 1
        %s487 = scalar_lea.sflag [#allocation3], %s486
        %s488 = sand.u32 %s46, 1
        %s489 = smul.addr %s488, 4
        %s490 = scalar_lea.vmem [#allocation2], %s489
        // Predicated region
        $region61: #{tpu_custom_call.1} parent=59 // pred_check
          %p491 = pneg %p59
        $region62: #{tpu_custom_call.1} parent=59 // pred_check_branch
          %493 = sbr.rel (%p491) target = $region64
        $region63: #{tpu_custom_call.1} parent=59 // pred_region
          %494 = dma.done %s487, 64
        $region64: #{tpu_custom_call.1} parent=59 // pred_fallthru
          _
        %s495 = sand.u32 %s38, 1
        %s496 = scalar_lea.sflag [#allocation6], %s495
        %s497 = sand.u32 %s72, 1
        %s498 = scalar_lea.vmem [#allocation5], %s497
        // Predicated region
        $region65: #{tpu_custom_call.1} parent=59 // pred_check
          %p499 = pneg %p85
        $region66: #{tpu_custom_call.1} parent=59 // pred_check_branch
          %501 = sbr.rel (%p499) target = $region68
        $region67: #{tpu_custom_call.1} parent=59 // pred_region
          %502 = dma.done %s496, 16
        $region68: #{tpu_custom_call.1} parent=59 // pred_fallthru
          _
        %s503 = sand.u32 %s38, 1
        %s504 = scalar_lea.sflag [#allocation6], %s503
        %s505 = sand.u32 %s98, 1
        %s506 = smul.addr %s505, 32
        %s507 = scalar_lea.vmem [#allocation7], %s506
        // Predicated region
        $region69: #{tpu_custom_call.1} parent=59 // pred_check
          %p508 = pneg %p111
        $region70: #{tpu_custom_call.1} parent=59 // pred_check_branch
          %510 = sbr.rel (%p508) target = $region72
        $region71: #{tpu_custom_call.1} parent=59 // pred_region
          %511 = dma.done %s504, 512
        $region72: #{tpu_custom_call.1} parent=59 // pred_fallthru
          _
        %s512 = sand.u32 %s38, 1
        %s513 = scalar_lea.sflag [#allocation9], %s512
        %s514 = sand.u32 %s124, 1
        %s515 = smul.addr %s514, 8
        %s516 = scalar_lea.vmem [#allocation8], %s515
        // Predicated region
        $region73: #{tpu_custom_call.1} parent=59 // pred_check
          %p517 = pneg %p137
        $region74: #{tpu_custom_call.1} parent=59 // pred_check_branch
          %519 = sbr.rel (%p517) target = $region76
        $region75: #{tpu_custom_call.1} parent=59 // pred_region
          %520 = dma.done %s513, 128
        $region76: #{tpu_custom_call.1} parent=59 // pred_fallthru
          _
        %s521 = sand.u32 %s38, 1
        %s522 = scalar_lea.sflag [#allocation9], %s521
        %s523 = sand.u32 %s150, 1
        %s524 = scalar_lea.vmem [#allocation10], %s523
        // Predicated region
        $region77: #{tpu_custom_call.1} parent=59 // pred_check
          %p525 = pneg %p163
        $region78: #{tpu_custom_call.1} parent=59 // pred_check_branch
          %527 = sbr.rel (%p525) target = $region80
        $region79: #{tpu_custom_call.1} parent=59 // pred_region
          %528 = dma.done %s522, 16
        $region80: #{tpu_custom_call.1} parent=59 // pred_fallthru
          _
        %s529 = sand.u32 %s38, 1
        %s530 = scalar_lea.sflag [#allocation12], %s529
        %s531 = sand.u32 %s176, 1
        %s532 = smul.addr %s531, 8
        %s533 = scalar_lea.vmem [#allocation11], %s532
        // Predicated region
        $region81: #{tpu_custom_call.1} parent=59 // pred_check
          %p534 = pneg %p189
        $region82: #{tpu_custom_call.1} parent=59 // pred_check_branch
          %536 = sbr.rel (%p534) target = $region84
        $region83: #{tpu_custom_call.1} parent=59 // pred_region
          %537 = dma.done %s530, 128
        $region84: #{tpu_custom_call.1} parent=59 // pred_fallthru
          _
        // Predicated region
        $region85: #{tpu_custom_call.1} parent=59 // pred_check
          %p538 = pneg %p210
        $region86: #{tpu_custom_call.1} parent=59 // pred_check_branch
          %540 = sbr.rel (%p538) target = $region88
        $region87: #{tpu_custom_call.1} parent=59 // pred_region
          %541 = dma.done [#allocation12], 3840
        $region88: #{tpu_custom_call.1} parent=59 // pred_fallthru
          _
        // Predicated region
        $region89: #{tpu_custom_call.1} parent=59 // pred_check
          %p542 = pneg %p231
        $region90: #{tpu_custom_call.1} parent=59 // pred_check_branch
          %544 = sbr.rel (%p542) target = $region92
        $region91: #{tpu_custom_call.1} parent=59 // pred_region
          %545 = dma.done [#allocation15], 640
        $region92: #{tpu_custom_call.1} parent=59 // pred_fallthru
          _
        // Predicated region
        $region93: #{tpu_custom_call.1} parent=59 // pred_check
          %p546 = pneg %p252
        $region94: #{tpu_custom_call.1} parent=59 // pred_check_branch
          %548 = sbr.rel (%p546) target = $region96
        $region95: #{tpu_custom_call.1} parent=59 // pred_region
          %549 = dma.done [#allocation15], 640
        $region96: #{tpu_custom_call.1} parent=59 // pred_fallthru
          _
        // Predicated region
        $region97: #{tpu_custom_call.1} parent=59 // pred_check
          %p550 = pneg %p273
        $region98: #{tpu_custom_call.1} parent=59 // pred_check_branch
          %552 = sbr.rel (%p550) target = $region100
        $region99: #{tpu_custom_call.1} parent=59 // pred_region
          %553 = dma.done [#allocation18], 640
        $region100: #{tpu_custom_call.1} parent=59 // pred_fallthru
          _
        %s554 = sand.u32 %s46, 1
        %s555 = scalar_lea.sflag [#allocation3], %s554
        %s556 = sand.u32 %s46, 1
        %s557 = smul.addr %s556, 4
        %s558 = scalar_lea.vmem [#allocation2], %s557
        %p559 = pneg %p59
        %p560 = pneg %p56
        %s561 = sand.u32 %s38, 1
        %s562 = scalar_lea.sflag [#allocation6], %s561
        %s563 = sand.u32 %s72, 1
        %s564 = scalar_lea.vmem [#allocation5], %s563
        %p565 = pneg %p85
        %p566 = pneg %p82
        %s567 = sand.u32 %s38, 1
        %s568 = scalar_lea.sflag [#allocation6], %s567
        %s569 = sand.u32 %s98, 1
        %s570 = smul.addr %s569, 32
        %s571 = scalar_lea.vmem [#allocation7], %s570
        %p572 = pneg %p111
        %p573 = pneg %p108
        %s574 = sand.u32 %s38, 1
        %s575 = scalar_lea.sflag [#allocation9], %s574
        %s576 = sand.u32 %s124, 1
        %s577 = smul.addr %s576, 8
        %s578 = scalar_lea.vmem [#allocation8], %s577
        %p579 = pneg %p137
        %p580 = pneg %p134
        %s581 = sand.u32 %s38, 1
        %s582 = scalar_lea.sflag [#allocation9], %s581
        %s583 = sand.u32 %s150, 1
        %s584 = scalar_lea.vmem [#allocation10], %s583
        %p585 = pneg %p163
        %p586 = pneg %p160
        %s587 = sand.u32 %s38, 1
        %s588 = scalar_lea.sflag [#allocation12], %s587
        %s589 = sand.u32 %s176, 1
        %s590 = smul.addr %s589, 8
        %s591 = scalar_lea.vmem [#allocation11], %s590
        %p592 = pneg %p189
        %p593 = pneg %p186
        %p594 = pneg %p210
        %p595 = pneg %p207
        %p596 = pneg %p231
        %p597 = pneg %p228
        %p598 = pneg %p252
        %p599 = pneg %p249
        %p600 = pneg %p273
        %p601 = pneg %p270
        %p602 = pneg %p299
        %p603 = pneg %p296
        %s604 = sand.u32 %s286, 1
        %s605 = scalar_lea.sflag [#allocation4], %s604
        %s606 = sand.u32 %s286, 1
        %s607 = scalar_lea.vmem [#allocation19], %s606
        %v608 = vld [vmem:[%s490] sm:$0xf]
        %v609 = vunpack.c.l.bf16 %v608
        %v610 = vld [vmem:[%s498] sm:$0x1]
        %v611 = vld [vmem:[%s507] sm:$0xf]
        %v612 = vld [vmem:[%s507 + $0x4] sm:$0xf]
        %v613 = vld [vmem:[%s507 + $0x8] sm:$0xf]
        %v614 = vld [vmem:[%s507 + $0xc] sm:$0xf]
        %v615 = vld [vmem:[%s507 + $0x10] sm:$0xf]
        %v616 = vld [vmem:[%s507 + $0x14] sm:$0xf]
        %v617 = vld [vmem:[%s507 + $0x18] sm:$0xf]
        %v618 = vld [vmem:[%s507 + $0x1c] sm:$0xf]
        %v619 = vunpack.c.l.bf16 %v611
        %v620 = vunpack.c.l.bf16 %v612
        %v621 = vunpack.c.l.bf16 %v613
        %v622 = vunpack.c.l.bf16 %v614
        %v623 = vunpack.c.l.bf16 %v615
        %v624 = vunpack.c.l.bf16 %v616
        %v625 = vunpack.c.l.bf16 %v617
        %v626 = vunpack.c.l.bf16 %v618
        %v627 = vld [vmem:[%s516] sm:$0xff]
        %v628 = vld [vmem:[%s524] sm:$0x1]
        %v629 = vld [vmem:[%s533] sm:$0xff]
        %vm630 = vcmask 57344
        %v631 = vsel %vm630, %v610, 0.0
        %632 = vadd.xlane.f32.xlu0 %v631
        %v633 = vpop.xlane.xlu0 %632
        %v634 = vmax.f32 %v633, 1.0
        %vm635 = vcmask 64512
        %v637 = vsel %vm635, %v610, 0
        %639 = vmatprep.subr.mxu0 0.0
        %640 = vmatpush1.msra.mxu0 %v609
        %641 = vmatprep.subr.mxu0 0.0
        %642 = vmatpush1.msra.mxu0 0.0
        %643 = vmatprep.subr.mxu0 0.0
        %644 = vmatpush1.msra.mxu0 0.0
        %645 = vmatprep.subr.mxu0 0.0
        %646 = vmatpush1.msra.mxu0 0.0
        %647 = vmatprep.subr.mxu0 0.0
        %648 = vmatpush1.msra.mxu0 0.0
        %649 = vmatprep.subr.mxu0 0.0
        %650 = vmatpush1.msra.mxu0 0.0
        %651 = vmatprep.subr.mxu0 0.0
        %652 = vmatpush1.msra.mxu0 0.0
        %653 = vmatprep.subr.mxu0 0.0
        %654 = vmatpush1.msra.mxu0 0.0
        %655 = vmatprep.subr.mxu0 0.0
        %656 = vmatpush1.msra.mxu0 0.0
        %657 = vmatprep.subr.mxu0 0.0
        %658 = vmatpush1.msra.mxu0 0.0
        %659 = vmatprep.subr.mxu0 0.0
        %660 = vmatpush1.msra.mxu0 0.0
        %661 = vmatprep.subr.mxu0 0.0
        %662 = vmatpush1.msra.mxu0 0.0
        %663 = vmatprep.subr.mxu0 0.0
        %664 = vmatpush1.msra.mxu0 0.0
        %665 = vmatprep.subr.mxu0 0.0
        %666 = vmatpush1.msra.mxu0 0.0
        %667 = vmatprep.subr.mxu0 0.0
        %668 = vmatpush1.msra.mxu0 0.0
        %669 = vmatprep.subr.mxu0 0.0
        %670 = vmatpush1.msra.mxu0 0.0
        %671 = vmatprep.subr.mxu0 0.0
        %672 = vmatpush1.msra.mxu0 0.0
        %673 = vmatprep.subr.mxu0 0.0
        %674 = vmatpush1.msra.mxu0 0.0
        %675 = vmatprep.subr.mxu0 0.0
        %676 = vmatpush1.msra.mxu0 0.0
        %677 = vmatprep.subr.mxu0 0.0
        %678 = vmatpush1.msra.mxu0 0.0
        %679 = vmatprep.subr.mxu0 0.0
        %680 = vmatpush1.msra.mxu0 0.0
        %681 = vmatprep.subr.mxu0 0.0
        %682 = vmatpush1.msra.mxu0 0.0
        %683 = vmatprep.subr.mxu0 0.0
        %684 = vmatpush1.msra.mxu0 0.0
        %685 = vmatprep.subr.mxu0 0.0
        %686 = vmatpush1.msra.mxu0 0.0
        %687 = vmatprep.subr.mxu0 0.0
        %688 = vmatpush1.msra.mxu0 0.0
        %689 = vmatprep.subr.mxu0 0.0
        %690 = vmatpush1.msra.mxu0 0.0
        %691 = vmatprep.subr.mxu0 0.0
        %692 = vmatpush1.msra.mxu0 0.0
        %693 = vmatprep.subr.mxu0 0.0
        %694 = vmatpush1.msra.mxu0 0.0
        %695 = vmatprep.subr.mxu0 0.0
        %696 = vmatpush1.msra.mxu0 0.0
        %697 = vmatprep.subr.mxu0 0.0
        %698 = vmatpush1.msra.mxu0 0.0
        %699 = vmatprep.subr.mxu0 0.0
        %700 = vmatpush1.msra.mxu0 0.0
        %701 = vmatprep.subr.mxu0 0.0
        %702 = vmatpush1.msra.mxu0 0.0
        %703 = vmatprep.mubr.f32.mxu0 0.0
        %704 = vmatmul.mubr.f32.gmra.mrb[0].mxu0 %v637
        %v705 = vpop.f32.mrb[0].mxu0
        %v706 = vadd.f32 0.0, %v705
        %v707 = vpop.f32.mrb[0].mxu0
        %708 = vdwg.mxu0
        %v709 = vrcp.pop %v634
        %v710 = vmul.f32 %v706, %v709
        %v711 = vsel %vm635, %v627, 0.0
        %712 = vadd.xlane.f32.xlu0 %v711
        %v713 = vpop.xlane.xlu0 %712
        %v714 = vmax.f32 %v713, 1.0
        %v715 = vlaneseq
        %v716 = vshrl.u32 %v715, 7
        %v717 = vsub.s32 0, %v716
        %v718 = vrot.slane %v627, %v717
        %720 = vbcast.lane.b32.xlu0 %v718, 256
        %v721 = vpop.permute.xlu0 %720
        %v722 = vlaneseq
        %v723 = vshrl.u32 %v722, 7
        %v724 = vsub.s32 1, %v723
        %v725 = vrot.slane %v627, %v724
        %727 = vbcast.lane.b32.xlu0 %v725, 256
        %v728 = vpop.permute.xlu0 %727
        %v729 = vlaneseq
        %v730 = vshrl.u32 %v729, 7
        %v731 = vsub.s32 2, %v730
        %v732 = vrot.slane %v627, %v731
        %734 = vbcast.lane.b32.xlu0 %v732, 256
        %v735 = vpop.permute.xlu0 %734
        %v736 = vlaneseq
        %v737 = vshrl.u32 %v736, 7
        %v738 = vsub.s32 3, %v737
        %v739 = vrot.slane %v627, %v738
        %741 = vbcast.lane.b32.xlu0 %v739, 256
        %v742 = vpop.permute.xlu0 %741
        %v743 = vlaneseq
        %v744 = vshrl.u32 %v743, 7
        %v745 = vsub.s32 4, %v744
        %v746 = vrot.slane %v627, %v745
        %748 = vbcast.lane.b32.xlu0 %v746, 256
        %v749 = vpop.permute.xlu0 %748
        %v750 = vlaneseq
        %v751 = vshrl.u32 %v750, 7
        %v752 = vsub.s32 5, %v751
        %v753 = vrot.slane %v627, %v752
        %755 = vbcast.lane.b32.xlu0 %v753, 256
        %v756 = vpop.permute.xlu0 %755
        %v757 = vlaneseq
        %v758 = vshrl.u32 %v757, 7
        %v759 = vsub.s32 6, %v758
        %v760 = vrot.slane %v627, %v759
        %762 = vbcast.lane.b32.xlu0 %v760, 256
        %v763 = vpop.permute.xlu0 %762
        %v764 = vlaneseq
        %v765 = vshrl.u32 %v764, 7
        %v766 = vsub.s32 7, %v765
        %v767 = vrot.slane %v627, %v766
        %769 = vbcast.lane.b32.xlu0 %v767, 256
        %v770 = vpop.permute.xlu0 %769
        %v771 = vmul.f32 %v619, %v721
        %v772 = vmul.f32 %v620, %v728
        %v773 = vmul.f32 %v621, %v735
        %v774 = vmul.f32 %v622, %v742
        %v775 = vmul.f32 %v623, %v749
        %v776 = vmul.f32 %v624, %v756
        %v777 = vmul.f32 %v625, %v763
        %v778 = vmul.f32 %v626, %v770
        %vm779 = vcmask 261120
        %v780 = vsel %vm779, %v771, 0.0
        %v781 = vrot.slane %v780, 4
        %v782 = vadd.f32 %v780, %v781
        %v783 = vrot.slane %v782, 2
        %v784 = vadd.f32 %v782, %v783
        %v785 = vrot.slane %v784, 1
        %v786 = vadd.f32 %v784, %v785
        %v787 = vsel %vm779, %v772, 0.0
        %v788 = vrot.slane %v787, 4
        %v789 = vadd.f32 %v787, %v788
        %v790 = vrot.slane %v789, 2
        %v791 = vadd.f32 %v789, %v790
        %v792 = vrot.slane %v791, 1
        %v793 = vadd.f32 %v791, %v792
        %v794 = vsel %vm779, %v773, 0.0
        %v795 = vrot.slane %v794, 4
        %v796 = vadd.f32 %v794, %v795
        %v797 = vrot.slane %v796, 2
        %v798 = vadd.f32 %v796, %v797
        %v799 = vrot.slane %v798, 1
        %v800 = vadd.f32 %v798, %v799
        %v801 = vsel %vm779, %v774, 0.0
        %v802 = vrot.slane %v801, 4
        %v803 = vadd.f32 %v801, %v802
        %v804 = vrot.slane %v803, 2
        %v805 = vadd.f32 %v803, %v804
        %v806 = vrot.slane %v805, 1
        %v807 = vadd.f32 %v805, %v806
        %v808 = vsel %vm779, %v775, 0.0
        %v809 = vrot.slane %v808, 4
        %v810 = vadd.f32 %v808, %v809
        %v811 = vrot.slane %v810, 2
        %v812 = vadd.f32 %v810, %v811
        %v813 = vrot.slane %v812, 1
        %v814 = vadd.f32 %v812, %v813
        %v815 = vsel %vm779, %v776, 0.0
        %v816 = vrot.slane %v815, 4
        %v817 = vadd.f32 %v815, %v816
        %v818 = vrot.slane %v817, 2
        %v819 = vadd.f32 %v817, %v818
        %v820 = vrot.slane %v819, 1
        %v821 = vadd.f32 %v819, %v820
        %v822 = vsel %vm779, %v777, 0.0
        %v823 = vrot.slane %v822, 4
        %v824 = vadd.f32 %v822, %v823
        %v825 = vrot.slane %v824, 2
        %v826 = vadd.f32 %v824, %v825
        %v827 = vrot.slane %v826, 1
        %v828 = vadd.f32 %v826, %v827
        %v829 = vsel %vm779, %v778, 0.0
        %v830 = vrot.slane %v829, 4
        %v831 = vadd.f32 %v829, %v830
        %v832 = vrot.slane %v831, 2
        %v833 = vadd.f32 %v831, %v832
        %v834 = vrot.slane %v833, 1
        %v835 = vadd.f32 %v833, %v834
        %v836 = vrcp.pop %v714
        %v838 = vrot.slane %v836, 1
        %v839 = vrot.slane %v836, 2
        %v840 = vrot.slane %v836, 3
        %v841 = vrot.slane %v836, 4
        %v842 = vrot.slane %v836, 5
        %v843 = vrot.slane %v836, 6
        %v844 = vrot.slane %v836, 7
        %v853 = vmul.f32 %v786, %v836
        %v854 = vmul.f32 %v793, %v838
        %v855 = vmul.f32 %v800, %v839
        %v856 = vmul.f32 %v807, %v840
        %v857 = vmul.f32 %v814, %v841
        %v858 = vmul.f32 %v821, %v842
        %v859 = vmul.f32 %v828, %v843
        %v860 = vmul.f32 %v835, %v844
        %862 = vset.pattern.permute.xlu0 0
        %863 = vperm.xlu0 %862, %v629
        %v864 = vpop.permute.xlu0 %863
        %v865 = vrot.slane %v864, 1
        %v866 = vrot.slane %v864, 2
        %v867 = vrot.slane %v864, 3
        %v868 = vrot.slane %v864, 4
        %v869 = vrot.slane %v864, 5
        %v870 = vrot.slane %v864, 6
        %v871 = vrot.slane %v864, 7
        %v880 = vmul.f32 %v853, %v864
        %v881 = vmul.f32 %v854, %v865
        %v882 = vmul.f32 %v855, %v866
        %v883 = vmul.f32 %v856, %v867
        %v884 = vmul.f32 %v857, %v868
        %v885 = vmul.f32 %v858, %v869
        %v886 = vmul.f32 %v859, %v870
        %v887 = vmul.f32 %v860, %v871
        %v888 = vld [vmem:[#allocation13] sm:$0xff]
        %v889 = vld [vmem:[#allocation13 + $0x8] sm:$0xff]
        %v890 = vld [vmem:[#allocation13 + $0x10] sm:$0xff]
        %v891 = vld [vmem:[#allocation13 + $0x18] sm:$0xff]
        %v893 = vsel %vm779, %v710, 0
        %895 = vmatprep.subr.mxu0 0.0
        %896 = vmatpush1.msra.mxu0 %v888
        %897 = vmatprep.subr.mxu0 0.0
        %898 = vmatpush1.msra.mxu0 %v889
        %899 = vmatprep.subr.mxu0 0.0
        %900 = vmatpush1.msra.mxu0 %v890
        %901 = vmatprep.subr.mxu0 0.0
        %902 = vmatpush1.msra.mxu0 %v891
        %903 = vmatprep.subr.mxu0 0.0
        %904 = vmatpush1.msra.mxu0 0.0
        %905 = vmatprep.subr.mxu0 0.0
        %906 = vmatpush1.msra.mxu0 0.0
        %907 = vmatprep.subr.mxu0 0.0
        %908 = vmatpush1.msra.mxu0 0.0
        %909 = vmatprep.subr.mxu0 0.0
        %910 = vmatpush1.msra.mxu0 0.0
        %911 = vmatprep.subr.mxu0 0.0
        %912 = vmatpush1.msra.mxu0 0.0
        %913 = vmatprep.subr.mxu0 0.0
        %914 = vmatpush1.msra.mxu0 0.0
        %915 = vmatprep.subr.mxu0 0.0
        %916 = vmatpush1.msra.mxu0 0.0
        %917 = vmatprep.subr.mxu0 0.0
        %918 = vmatpush1.msra.mxu0 0.0
        %919 = vmatprep.subr.mxu0 0.0
        %920 = vmatpush1.msra.mxu0 0.0
        %921 = vmatprep.subr.mxu0 0.0
        %922 = vmatpush1.msra.mxu0 0.0
        %923 = vmatprep.subr.mxu0 0.0
        %924 = vmatpush1.msra.mxu0 0.0
        %925 = vmatprep.subr.mxu0 0.0
        %926 = vmatpush1.msra.mxu0 0.0
        %927 = vmatprep.subr.mxu0 0.0
        %928 = vmatpush1.msra.mxu0 0.0
        %929 = vmatprep.subr.mxu0 0.0
        %930 = vmatpush1.msra.mxu0 0.0
        %931 = vmatprep.subr.mxu0 0.0
        %932 = vmatpush1.msra.mxu0 0.0
        %933 = vmatprep.subr.mxu0 0.0
        %934 = vmatpush1.msra.mxu0 0.0
        %935 = vmatprep.subr.mxu0 0.0
        %936 = vmatpush1.msra.mxu0 0.0
        %937 = vmatprep.subr.mxu0 0.0
        %938 = vmatpush1.msra.mxu0 0.0
        %939 = vmatprep.subr.mxu0 0.0
        %940 = vmatpush1.msra.mxu0 0.0
        %941 = vmatprep.subr.mxu0 0.0
        %942 = vmatpush1.msra.mxu0 0.0
        %943 = vmatprep.subr.mxu0 0.0
        %944 = vmatpush1.msra.mxu0 0.0
        %945 = vmatprep.subr.mxu0 0.0
        %946 = vmatpush1.msra.mxu0 0.0
        %947 = vmatprep.subr.mxu0 0.0
        %948 = vmatpush1.msra.mxu0 0.0
        %949 = vmatprep.subr.mxu0 0.0
        %950 = vmatpush1.msra.mxu0 0.0
        %951 = vmatprep.subr.mxu0 0.0
        %952 = vmatpush1.msra.mxu0 0.0
        %953 = vmatprep.subr.mxu0 0.0
        %954 = vmatpush1.msra.mxu0 0.0
        %955 = vmatprep.subr.mxu0 0.0
        %956 = vmatpush1.msra.mxu0 0.0
        %957 = vmatprep.subr.mxu0 0.0
        %958 = vmatpush1.msra.mxu0 0.0
        %959 = vmatprep.mubr.f32.mxu0 0.0
        %960 = vmatmul.mubr.f32.gmra.mrb[0].mxu0 %v893
        %v961 = vpop.f32.mrb[0].mxu0
        %v962 = vadd.f32 0.0, %v961
        %v963 = vpop.f32.mrb[0].mxu0
        %964 = vdwg.mxu0
        %v965 = vld [vmem:[#allocation13 + $0x20] sm:$0xff]
        %v966 = vld [vmem:[#allocation13 + $0x28] sm:$0xff]
        %v967 = vld [vmem:[#allocation13 + $0x30] sm:$0xff]
        %v968 = vld [vmem:[#allocation13 + $0x38] sm:$0xff]
        %v969 = vlaneseq
        %v970 = vshrl.u32 %v969, 7
        %v971 = vsub.s32 0, %v970
        %v972 = vrot.slane %v962, %v971
        %v981 = vrot.slane %v881, 7
        %vm982 = vcmask 1041409
        %v983 = vsel %vm982, %v981, %v880
        %v984 = vrot.slane %v882, 6
        %vm985 = vcmask 1042434
        %v986 = vsel %vm985, %v984, %v983
        %v987 = vrot.slane %v883, 5
        %vm988 = vcmask 1043459
        %v989 = vsel %vm988, %v987, %v986
        %v990 = vrot.slane %v884, 4
        %vm991 = vcmask 1044484
        %v992 = vsel %vm991, %v990, %v989
        %v993 = vrot.slane %v885, 3
        %vm994 = vcmask 1045509
        %v995 = vsel %vm994, %v993, %v992
        %v996 = vrot.slane %v886, 2
        %vm997 = vcmask 1046534
        %v998 = vsel %vm997, %v996, %v995
        %v999 = vrot.slane %v887, 1
        %vm1000 = vcmask 1047559
        %v1001 = vsel %vm1000, %v999, %v998
        %v1002 = vsel %vm779, %v1001, 0
        %1004 = vmatprep.subr.mxu0 0.0
        %1005 = vmatpush1.msra.mxu0 %v965
        %1006 = vmatprep.subr.mxu0 0.0
        %1007 = vmatpush1.msra.mxu0 %v966
        %1008 = vmatprep.subr.mxu0 0.0
        %1009 = vmatpush1.msra.mxu0 %v967
        %1010 = vmatprep.subr.mxu0 0.0
        %1011 = vmatpush1.msra.mxu0 %v968
        %1012 = vmatprep.subr.mxu0 0.0
        %1013 = vmatpush1.msra.mxu0 0.0
        %1014 = vmatprep.subr.mxu0 0.0
        %1015 = vmatpush1.msra.mxu0 0.0
        %1016 = vmatprep.subr.mxu0 0.0
        %1017 = vmatpush1.msra.mxu0 0.0
        %1018 = vmatprep.subr.mxu0 0.0
        %1019 = vmatpush1.msra.mxu0 0.0
        %1020 = vmatprep.subr.mxu0 0.0
        %1021 = vmatpush1.msra.mxu0 0.0
        %1022 = vmatprep.subr.mxu0 0.0
        %1023 = vmatpush1.msra.mxu0 0.0
        %1024 = vmatprep.subr.mxu0 0.0
        %1025 = vmatpush1.msra.mxu0 0.0
        %1026 = vmatprep.subr.mxu0 0.0
        %1027 = vmatpush1.msra.mxu0 0.0
        %1028 = vmatprep.subr.mxu0 0.0
        %1029 = vmatpush1.msra.mxu0 0.0
        %1030 = vmatprep.subr.mxu0 0.0
        %1031 = vmatpush1.msra.mxu0 0.0
        %1032 = vmatprep.subr.mxu0 0.0
        %1033 = vmatpush1.msra.mxu0 0.0
        %1034 = vmatprep.subr.mxu0 0.0
        %1035 = vmatpush1.msra.mxu0 0.0
        %1036 = vmatprep.subr.mxu0 0.0
        %1037 = vmatpush1.msra.mxu0 0.0
        %1038 = vmatprep.subr.mxu0 0.0
        %1039 = vmatpush1.msra.mxu0 0.0
        %1040 = vmatprep.subr.mxu0 0.0
        %1041 = vmatpush1.msra.mxu0 0.0
        %1042 = vmatprep.subr.mxu0 0.0
        %1043 = vmatpush1.msra.mxu0 0.0
        %1044 = vmatprep.subr.mxu0 0.0
        %1045 = vmatpush1.msra.mxu0 0.0
        %1046 = vmatprep.subr.mxu0 0.0
        %1047 = vmatpush1.msra.mxu0 0.0
        %1048 = vmatprep.subr.mxu0 0.0
        %1049 = vmatpush1.msra.mxu0 0.0
        %1050 = vmatprep.subr.mxu0 0.0
        %1051 = vmatpush1.msra.mxu0 0.0
        %1052 = vmatprep.subr.mxu0 0.0
        %1053 = vmatpush1.msra.mxu0 0.0
        %1054 = vmatprep.subr.mxu0 0.0
        %1055 = vmatpush1.msra.mxu0 0.0
        %1056 = vmatprep.subr.mxu0 0.0
        %1057 = vmatpush1.msra.mxu0 0.0
        %1058 = vmatprep.subr.mxu0 0.0
        %1059 = vmatpush1.msra.mxu0 0.0
        %1060 = vmatprep.subr.mxu0 0.0
        %1061 = vmatpush1.msra.mxu0 0.0
        %1062 = vmatprep.subr.mxu0 0.0
        %1063 = vmatpush1.msra.mxu0 0.0
        %1064 = vmatprep.subr.mxu0 0.0
        %1065 = vmatpush1.msra.mxu0 0.0
        %1066 = vmatprep.subr.mxu0 0.0
        %1067 = vmatpush1.msra.mxu0 0.0
        %1068 = vmatprep.mubr.f32.mxu0 0.0
        %1069 = vmatmul.mubr.f32.gmra.mrb[0].mxu0 %v1002
        %v1070 = vpop.f32.mrb[0].mxu0
        %v1071 = vadd.f32 %v972, %v1070
        %v1072 = vpop.f32.mrb[0].mxu0
        %1073 = vdwg.mxu0
        %v1074 = vld [vmem:[#allocation13 + $0xe0] sm:$0x1]
        %v1075 = vlaneseq
        %v1076 = vshrl.u32 %v1075, 7
        %v1077 = vsub.s32 0, %v1076
        %v1078 = vrot.slane %v1074, %v1077
        %v1079 = vadd.f32 %v1071, %v1078
        %v1080 = vmax.f32 %v1079, 0.0
        %v1081 = vld [vmem:[#allocation13 + $0xe1] sm:$0x1]
        %v1082 = vld [vmem:[#allocation13 + $0xe2] sm:$0x1]
        %v1083 = vsel %vm779, %v1080, 0.0
        %1084 = vadd.xlane.f32.xlu0 %v1083
        %v1085 = vpop.xlane.xlu0 %1084
        %v1086 = vrcp.pop 32.0
        %v1087 = vmul.f32 %v1085, %v1086
        %v1088 = vsub.f32 %v1080, %v1087
        %v1089 = vmul.f32 %v1088, %v1088
        %v1090 = vsel %vm779, %v1089, 0.0
        %1091 = vadd.xlane.f32.xlu0 %v1090
        %v1092 = vpop.xlane.xlu0 %1091
        %v1093 = vmul.f32 %v1092, %v1086
        %v1094 = vadd.f32 %v1093, 1e-05
        %v1095 = vrsqrt.pop %v1094
        %v1096 = vmul.f32 %v1088, %v1095
        %v1097 = vlaneseq
        %v1098 = vshrl.u32 %v1097, 7
        %v1099 = vsub.s32 0, %v1098
        %v1100 = vrot.slane %v1081, %v1099
        %v1101 = vmul.f32 %v1096, %v1100
        %v1102 = vlaneseq
        %v1103 = vshrl.u32 %v1102, 7
        %v1104 = vsub.s32 0, %v1103
        %v1105 = vrot.slane %v1082, %v1104
        %v1106 = vadd.f32 %v1101, %v1105
        %v1107 = vsub.f32 %v628, 1.0
        %v1108 = vmul.f32 %v1107, 1e+30
        %v1109 = vld [vmem:[#allocation14] sm:$0xff]
        %v1110 = vld [vmem:[#allocation14 + $0x8] sm:$0xff]
        %v1111 = vld [vmem:[#allocation14 + $0x10] sm:$0xff]
        %v1112 = vld [vmem:[#allocation14 + $0x18] sm:$0xff]
        %v1113 = vld [vmem:[#allocation14 + $0x20] sm:$0x1]
        %v1114 = vlaneseq
        %v1115 = vshrl.u32 %v1114, 7
        %v1116 = vsub.s32 0, %v1115
        %v1117 = vrot.slane %v1113, %v1116
        %v1119 = vsel %vm779, %v1106, 0
        %1121 = vmatprep.subr.mxu0 0.0
        %1122 = vmatpush1.msra.mxu0 %v1109
        %1123 = vmatprep.subr.mxu0 0.0
        %1124 = vmatpush1.msra.mxu0 %v1110
        %1125 = vmatprep.subr.mxu0 0.0
        %1126 = vmatpush1.msra.mxu0 %v1111
        %1127 = vmatprep.subr.mxu0 0.0
        %1128 = vmatpush1.msra.mxu0 %v1112
        %1129 = vmatprep.subr.mxu0 0.0
        %1130 = vmatpush1.msra.mxu0 0.0
        %1131 = vmatprep.subr.mxu0 0.0
        %1132 = vmatpush1.msra.mxu0 0.0
        %1133 = vmatprep.subr.mxu0 0.0
        %1134 = vmatpush1.msra.mxu0 0.0
        %1135 = vmatprep.subr.mxu0 0.0
        %1136 = vmatpush1.msra.mxu0 0.0
        %1137 = vmatprep.subr.mxu0 0.0
        %1138 = vmatpush1.msra.mxu0 0.0
        %1139 = vmatprep.subr.mxu0 0.0
        %1140 = vmatpush1.msra.mxu0 0.0
        %1141 = vmatprep.subr.mxu0 0.0
        %1142 = vmatpush1.msra.mxu0 0.0
        %1143 = vmatprep.subr.mxu0 0.0
        %1144 = vmatpush1.msra.mxu0 0.0
        %1145 = vmatprep.subr.mxu0 0.0
        %1146 = vmatpush1.msra.mxu0 0.0
        %1147 = vmatprep.subr.mxu0 0.0
        %1148 = vmatpush1.msra.mxu0 0.0
        %1149 = vmatprep.subr.mxu0 0.0
        %1150 = vmatpush1.msra.mxu0 0.0
        %1151 = vmatprep.subr.mxu0 0.0
        %1152 = vmatpush1.msra.mxu0 0.0
        %1153 = vmatprep.subr.mxu0 0.0
        %1154 = vmatpush1.msra.mxu0 0.0
        %1155 = vmatprep.subr.mxu0 0.0
        %1156 = vmatpush1.msra.mxu0 0.0
        %1157 = vmatprep.subr.mxu0 0.0
        %1158 = vmatpush1.msra.mxu0 0.0
        %1159 = vmatprep.subr.mxu0 0.0
        %1160 = vmatpush1.msra.mxu0 0.0
        %1161 = vmatprep.subr.mxu0 0.0
        %1162 = vmatpush1.msra.mxu0 0.0
        %1163 = vmatprep.subr.mxu0 0.0
        %1164 = vmatpush1.msra.mxu0 0.0
        %1165 = vmatprep.subr.mxu0 0.0
        %1166 = vmatpush1.msra.mxu0 0.0
        %1167 = vmatprep.subr.mxu0 0.0
        %1168 = vmatpush1.msra.mxu0 0.0
        %1169 = vmatprep.subr.mxu0 0.0
        %1170 = vmatpush1.msra.mxu0 0.0
        %1171 = vmatprep.subr.mxu0 0.0
        %1172 = vmatpush1.msra.mxu0 0.0
        %1173 = vmatprep.subr.mxu0 0.0
        %1174 = vmatpush1.msra.mxu0 0.0
        %1175 = vmatprep.subr.mxu0 0.0
        %1176 = vmatpush1.msra.mxu0 0.0
        %1177 = vmatprep.subr.mxu0 0.0
        %1178 = vmatpush1.msra.mxu0 0.0
        %1179 = vmatprep.subr.mxu0 0.0
        %1180 = vmatpush1.msra.mxu0 0.0
        %1181 = vmatprep.subr.mxu0 0.0
        %1182 = vmatpush1.msra.mxu0 0.0
        %1183 = vmatprep.subr.mxu0 0.0
        %1184 = vmatpush1.msra.mxu0 0.0
        %1185 = vmatprep.mubr.f32.mxu0 0.0
        %1186 = vmatmul.mubr.f32.gmra.mrb[0].mxu0 %v1119
        %v1187 = vpop.f32.mrb[0].mxu0
        %v1188 = vadd.f32 %v1117, %v1187
        %v1189 = vpop.f32.mrb[0].mxu0
        %1190 = vdwg.mxu0
        %v1191 = vlaneseq
        %v1192 = vand.u32 %v1191, 127
        %vm1193 = vcmp.ge.s32.totalorder %v1192, 0
        %vm1194 = vcmp.lt.s32.totalorder %v1192, 8
        %vm1195 = vmand %vm1193, %vm1194
        %v1196 = vsel %vm1195, 1, 0
        %v1197 = vcvt.s32.f32 %v1196
        %vm1198 = vcmp.ge.s32.totalorder %v1192, 8
        %vm1199 = vcmp.lt.s32.totalorder %v1192, 16
        %vm1200 = vmand %vm1198, %vm1199
        %v1201 = vsel %vm1200, 1, 0
        %v1202 = vcvt.s32.f32 %v1201
        %vm1203 = vcmp.ge.s32.totalorder %v1192, 16
        %vm1204 = vcmp.lt.s32.totalorder %v1192, 24
        %vm1205 = vmand %vm1203, %vm1204
        %v1206 = vsel %vm1205, 1, 0
        %v1207 = vcvt.s32.f32 %v1206
        %vm1208 = vcmp.ge.s32.totalorder %v1192, 24
        %vm1209 = vcmp.lt.s32.totalorder %v1192, 32
        %vm1210 = vmand %vm1208, %vm1209
        %v1211 = vsel %vm1210, 1, 0
        %v1212 = vcvt.s32.f32 %v1211
        %v1213 = vmul.f32 %v1188, %v1197
        %1215 = vrot.lane.b32.xlu0 %v1188, 96
        %v1216 = vpop.permute.xlu0 %1215
        %v1218 = vsel %vm779, %v1213, 0
        %v1220 = vsel %vm779, %v1216, 0
        %1222 = vmatprep.subr.mxu0 0.0
        %1223 = vmatpush1.xpose.msra.mxu0 %v1220
        %1224 = vmatprep.subr.mxu0 0.0
        %1225 = vmatpush1.xpose.msra.mxu0 0.0
        %1226 = vmatprep.subr.mxu0 0.0
        %1227 = vmatpush1.xpose.msra.mxu0 0.0
        %1228 = vmatprep.subr.mxu0 0.0
        %1229 = vmatpush1.xpose.msra.mxu0 0.0
        %1230 = vmatprep.subr.mxu0 0.0
        %1231 = vmatpush1.xpose.msra.mxu0 0.0
        %1232 = vmatprep.subr.mxu0 0.0
        %1233 = vmatpush1.xpose.msra.mxu0 0.0
        %1234 = vmatprep.subr.mxu0 0.0
        %1235 = vmatpush1.xpose.msra.mxu0 0.0
        %1236 = vmatprep.subr.mxu0 0.0
        %1237 = vmatpush1.xpose.msra.mxu0 0.0
        %1238 = vmatprep.subr.mxu0 0.0
        %1239 = vmatpush1.xpose.msra.mxu0 0.0
        %1240 = vmatprep.subr.mxu0 0.0
        %1241 = vmatpush1.xpose.msra.mxu0 0.0
        %1242 = vmatprep.subr.mxu0 0.0
        %1243 = vmatpush1.xpose.msra.mxu0 0.0
        %1244 = vmatprep.subr.mxu0 0.0
        %1245 = vmatpush1.xpose.msra.mxu0 0.0
        %1246 = vmatprep.subr.mxu0 0.0
        %1247 = vmatpush1.xpose.msra.mxu0 0.0
        %1248 = vmatprep.subr.mxu0 0.0
        %1249 = vmatpush1.xpose.msra.mxu0 0.0
        %1250 = vmatprep.subr.mxu0 0.0
        %1251 = vmatpush1.xpose.msra.mxu0 0.0
        %1252 = vmatprep.subr.mxu0 0.0
        %1253 = vmatpush1.xpose.msra.mxu0 0.0
        %1254 = vmatprep.subr.mxu0 0.0
        %1255 = vmatpush1.xpose.msra.mxu0 0.0
        %1256 = vmatprep.subr.mxu0 0.0
        %1257 = vmatpush1.xpose.msra.mxu0 0.0
        %1258 = vmatprep.subr.mxu0 0.0
        %1259 = vmatpush1.xpose.msra.mxu0 0.0
        %1260 = vmatprep.subr.mxu0 0.0
        %1261 = vmatpush1.xpose.msra.mxu0 0.0
        %1262 = vmatprep.subr.mxu0 0.0
        %1263 = vmatpush1.xpose.msra.mxu0 0.0
        %1264 = vmatprep.subr.mxu0 0.0
        %1265 = vmatpush1.xpose.msra.mxu0 0.0
        %1266 = vmatprep.subr.mxu0 0.0
        %1267 = vmatpush1.xpose.msra.mxu0 0.0
        %1268 = vmatprep.subr.mxu0 0.0
        %1269 = vmatpush1.xpose.msra.mxu0 0.0
        %1270 = vmatprep.subr.mxu0 0.0
        %1271 = vmatpush1.xpose.msra.mxu0 0.0
        %1272 = vmatprep.subr.mxu0 0.0
        %1273 = vmatpush1.xpose.msra.mxu0 0.0
        %1274 = vmatprep.subr.mxu0 0.0
        %1275 = vmatpush1.xpose.msra.mxu0 0.0
        %1276 = vmatprep.subr.mxu0 0.0
        %1277 = vmatpush1.xpose.msra.mxu0 0.0
        %1278 = vmatprep.subr.mxu0 0.0
        %1279 = vmatpush1.xpose.msra.mxu0 0.0
        %1280 = vmatprep.subr.mxu0 0.0
        %1281 = vmatpush1.xpose.msra.mxu0 0.0
        %1282 = vmatprep.subr.mxu0 0.0
        %1283 = vmatpush1.xpose.msra.mxu0 0.0
        %1284 = vmatprep.subr.mxu0 0.0
        %1285 = vmatpush1.xpose.msra.mxu0 0.0
        %1286 = vmatprep.mubr.f32.mxu0 0.0
        %1287 = vmatmul.mubr.f32.gmra.mrb[0].mxu0 %v1218
        %v1288 = vpop.f32.mrb[0].mxu0
        %v1289 = vadd.f32 0.0, %v1288
        %v1290 = vpop.f32.mrb[0].mxu0
        %1291 = vdwg.mxu0
        %v1292 = vmul.f32 %v1289, 0.35355338
        %v1294 = vlaneseq
        %v1295 = vshrl.u32 %v1294, 7
        %v1296 = vsub.s32 0, %v1295
        %v1297 = vrot.slane %v1108, %v1296
        %v1299 = vadd.f32 %v1292, %v1297
        %v1300 = vsel %vm635, %v1299, -inf
        %1301 = vmax.xlane.f32.xlu0 %v1300
        %v1302 = vpop.xlane.xlu0 %1301
        %v1303 = vsub.f32 %v1299, %v1302
        %v1304 = vmul.f32 %v1303, 1.442695
        %v1305 = vpow.pop %v1304
        %v1306 = vsel %vm635, %v1305, 0.0
        %1307 = vadd.xlane.f32.xlu0 %v1306
        %v1308 = vpop.xlane.xlu0 %1307
        %v1309 = vrcp.pop %v1308
        %v1310 = vmul.f32 %v1305, %v1309
        %1312 = vrot.lane.b32.xlu0 %v1197, 64
        %v1313 = vpop.permute.xlu0 %1312
        %v1315 = vmul.f32 %v1188, %v1313
        %v1316 = vmul.f32 %v1188, %v1202
        %v1318 = vsel %vm779, %v1316, 0
        %1320 = vmatprep.subr.mxu0 0.0
        %1321 = vmatpush1.xpose.msra.mxu0 %v1220
        %1322 = vmatprep.subr.mxu0 0.0
        %1323 = vmatpush1.xpose.msra.mxu0 0.0
        %1324 = vmatprep.subr.mxu0 0.0
        %1325 = vmatpush1.xpose.msra.mxu0 0.0
        %1326 = vmatprep.subr.mxu0 0.0
        %1327 = vmatpush1.xpose.msra.mxu0 0.0
        %1328 = vmatprep.subr.mxu0 0.0
        %1329 = vmatpush1.xpose.msra.mxu0 0.0
        %1330 = vmatprep.subr.mxu0 0.0
        %1331 = vmatpush1.xpose.msra.mxu0 0.0
        %1332 = vmatprep.subr.mxu0 0.0
        %1333 = vmatpush1.xpose.msra.mxu0 0.0
        %1334 = vmatprep.subr.mxu0 0.0
        %1335 = vmatpush1.xpose.msra.mxu0 0.0
        %1336 = vmatprep.subr.mxu0 0.0
        %1337 = vmatpush1.xpose.msra.mxu0 0.0
        %1338 = vmatprep.subr.mxu0 0.0
        %1339 = vmatpush1.xpose.msra.mxu0 0.0
        %1340 = vmatprep.subr.mxu0 0.0
        %1341 = vmatpush1.xpose.msra.mxu0 0.0
        %1342 = vmatprep.subr.mxu0 0.0
        %1343 = vmatpush1.xpose.msra.mxu0 0.0
        %1344 = vmatprep.subr.mxu0 0.0
        %1345 = vmatpush1.xpose.msra.mxu0 0.0
        %1346 = vmatprep.subr.mxu0 0.0
        %1347 = vmatpush1.xpose.msra.mxu0 0.0
        %1348 = vmatprep.subr.mxu0 0.0
        %1349 = vmatpush1.xpose.msra.mxu0 0.0
        %1350 = vmatprep.subr.mxu0 0.0
        %1351 = vmatpush1.xpose.msra.mxu0 0.0
        %1352 = vmatprep.subr.mxu0 0.0
        %1353 = vmatpush1.xpose.msra.mxu0 0.0
        %1354 = vmatprep.subr.mxu0 0.0
        %1355 = vmatpush1.xpose.msra.mxu0 0.0
        %1356 = vmatprep.subr.mxu0 0.0
        %1357 = vmatpush1.xpose.msra.mxu0 0.0
        %1358 = vmatprep.subr.mxu0 0.0
        %1359 = vmatpush1.xpose.msra.mxu0 0.0
        %1360 = vmatprep.subr.mxu0 0.0
        %1361 = vmatpush1.xpose.msra.mxu0 0.0
        %1362 = vmatprep.subr.mxu0 0.0
        %1363 = vmatpush1.xpose.msra.mxu0 0.0
        %1364 = vmatprep.subr.mxu0 0.0
        %1365 = vmatpush1.xpose.msra.mxu0 0.0
        %1366 = vmatprep.subr.mxu0 0.0
        %1367 = vmatpush1.xpose.msra.mxu0 0.0
        %1368 = vmatprep.subr.mxu0 0.0
        %1369 = vmatpush1.xpose.msra.mxu0 0.0
        %1370 = vmatprep.subr.mxu0 0.0
        %1371 = vmatpush1.xpose.msra.mxu0 0.0
        %1372 = vmatprep.subr.mxu0 0.0
        %1373 = vmatpush1.xpose.msra.mxu0 0.0
        %1374 = vmatprep.subr.mxu0 0.0
        %1375 = vmatpush1.xpose.msra.mxu0 0.0
        %1376 = vmatprep.subr.mxu0 0.0
        %1377 = vmatpush1.xpose.msra.mxu0 0.0
        %1378 = vmatprep.subr.mxu0 0.0
        %1379 = vmatpush1.xpose.msra.mxu0 0.0
        %1380 = vmatprep.subr.mxu0 0.0
        %1381 = vmatpush1.xpose.msra.mxu0 0.0
        %1382 = vmatprep.subr.mxu0 0.0
        %1383 = vmatpush1.xpose.msra.mxu0 0.0
        %1384 = vmatprep.mubr.f32.mxu0 0.0
        %1385 = vmatmul.mubr.f32.gmra.mrb[0].mxu0 %v1318
        %v1386 = vpop.f32.mrb[0].mxu0
        %v1387 = vadd.f32 0.0, %v1386
        %v1388 = vpop.f32.mrb[0].mxu0
        %1389 = vdwg.mxu0
        %v1390 = vmul.f32 %v1387, 0.35355338
        %v1391 = vadd.f32 %v1390, %v1297
        %v1392 = vsel %vm635, %v1391, -inf
        %1393 = vmax.xlane.f32.xlu0 %v1392
        %v1394 = vpop.xlane.xlu0 %1393
        %v1395 = vsub.f32 %v1391, %v1394
        %v1396 = vmul.f32 %v1395, 1.442695
        %v1397 = vpow.pop %v1396
        %v1398 = vsel %vm635, %v1397, 0.0
        %1399 = vadd.xlane.f32.xlu0 %v1398
        %v1400 = vpop.xlane.xlu0 %1399
        %v1401 = vrcp.pop %v1400
        %v1402 = vmul.f32 %v1397, %v1401
        %1404 = vrot.lane.b32.xlu0 %v1202, 64
        %v1405 = vpop.permute.xlu0 %1404
        %v1407 = vmul.f32 %v1188, %v1405
        %1409 = vrot.lane.b32.xlu0 %v1407, 64
        %v1410 = vpop.permute.xlu0 %1409
        %v1413 = vsel %vm635, %v1402, 0
        %1415 = vmatprep.subr.mxu0 0.0
        %1416 = vmatpush1.msra.mxu0 %v1410
        %1417 = vmatprep.subr.mxu0 0.0
        %1418 = vmatpush1.msra.mxu0 0.0
        %1419 = vmatprep.subr.mxu0 0.0
        %1420 = vmatpush1.msra.mxu0 0.0
        %1421 = vmatprep.subr.mxu0 0.0
        %1422 = vmatpush1.msra.mxu0 0.0
        %1423 = vmatprep.subr.mxu0 0.0
        %1424 = vmatpush1.msra.mxu0 0.0
        %1425 = vmatprep.subr.mxu0 0.0
        %1426 = vmatpush1.msra.mxu0 0.0
        %1427 = vmatprep.subr.mxu0 0.0
        %1428 = vmatpush1.msra.mxu0 0.0
        %1429 = vmatprep.subr.mxu0 0.0
        %1430 = vmatpush1.msra.mxu0 0.0
        %1431 = vmatprep.subr.mxu0 0.0
        %1432 = vmatpush1.msra.mxu0 0.0
        %1433 = vmatprep.subr.mxu0 0.0
        %1434 = vmatpush1.msra.mxu0 0.0
        %1435 = vmatprep.subr.mxu0 0.0
        %1436 = vmatpush1.msra.mxu0 0.0
        %1437 = vmatprep.subr.mxu0 0.0
        %1438 = vmatpush1.msra.mxu0 0.0
        %1439 = vmatprep.subr.mxu0 0.0
        %1440 = vmatpush1.msra.mxu0 0.0
        %1441 = vmatprep.subr.mxu0 0.0
        %1442 = vmatpush1.msra.mxu0 0.0
        %1443 = vmatprep.subr.mxu0 0.0
        %1444 = vmatpush1.msra.mxu0 0.0
        %1445 = vmatprep.subr.mxu0 0.0
        %1446 = vmatpush1.msra.mxu0 0.0
        %1447 = vmatprep.subr.mxu0 0.0
        %1448 = vmatpush1.msra.mxu0 0.0
        %1449 = vmatprep.subr.mxu0 0.0
        %1450 = vmatpush1.msra.mxu0 0.0
        %1451 = vmatprep.subr.mxu0 0.0
        %1452 = vmatpush1.msra.mxu0 0.0
        %1453 = vmatprep.subr.mxu0 0.0
        %1454 = vmatpush1.msra.mxu0 0.0
        %1455 = vmatprep.subr.mxu0 0.0
        %1456 = vmatpush1.msra.mxu0 0.0
        %1457 = vmatprep.subr.mxu0 0.0
        %1458 = vmatpush1.msra.mxu0 0.0
        %1459 = vmatprep.subr.mxu0 0.0
        %1460 = vmatpush1.msra.mxu0 0.0
        %1461 = vmatprep.subr.mxu0 0.0
        %1462 = vmatpush1.msra.mxu0 0.0
        %1463 = vmatprep.subr.mxu0 0.0
        %1464 = vmatpush1.msra.mxu0 0.0
        %1465 = vmatprep.subr.mxu0 0.0
        %1466 = vmatpush1.msra.mxu0 0.0
        %1467 = vmatprep.subr.mxu0 0.0
        %1468 = vmatpush1.msra.mxu0 0.0
        %1469 = vmatprep.subr.mxu0 0.0
        %1470 = vmatpush1.msra.mxu0 0.0
        %1471 = vmatprep.subr.mxu0 0.0
        %1472 = vmatpush1.msra.mxu0 0.0
        %1473 = vmatprep.subr.mxu0 0.0
        %1474 = vmatpush1.msra.mxu0 0.0
        %1475 = vmatprep.subr.mxu0 0.0
        %1476 = vmatpush1.msra.mxu0 0.0
        %1477 = vmatprep.subr.mxu0 0.0
        %1478 = vmatpush1.msra.mxu0 0.0
        %1479 = vmatprep.mubr.f32.mxu0 0.0
        %1480 = vmatmul.mubr.f32.gmra.mrb[0].mxu0 %v1413
        %v1481 = vpop.f32.mrb[0].mxu0
        %v1482 = vadd.f32 0.0, %v1481
        %v1483 = vpop.f32.mrb[0].mxu0
        %1484 = vdwg.mxu0
        %1486 = vrot.lane.b32.xlu0 %v1315, 64
        %v1487 = vpop.permute.xlu0 %1486
        %v1490 = vsel %vm635, %v1310, 0
        %1492 = vmatprep.subr.mxu0 0.0
        %1493 = vmatpush1.msra.mxu0 %v1487
        %1494 = vmatprep.subr.mxu0 0.0
        %1495 = vmatpush1.msra.mxu0 0.0
        %1496 = vmatprep.subr.mxu0 0.0
        %1497 = vmatpush1.msra.mxu0 0.0
        %1498 = vmatprep.subr.mxu0 0.0
        %1499 = vmatpush1.msra.mxu0 0.0
        %1500 = vmatprep.subr.mxu0 0.0
        %1501 = vmatpush1.msra.mxu0 0.0
        %1502 = vmatprep.subr.mxu0 0.0
        %1503 = vmatpush1.msra.mxu0 0.0
        %1504 = vmatprep.subr.mxu0 0.0
        %1505 = vmatpush1.msra.mxu0 0.0
        %1506 = vmatprep.subr.mxu0 0.0
        %1507 = vmatpush1.msra.mxu0 0.0
        %1508 = vmatprep.subr.mxu0 0.0
        %1509 = vmatpush1.msra.mxu0 0.0
        %1510 = vmatprep.subr.mxu0 0.0
        %1511 = vmatpush1.msra.mxu0 0.0
        %1512 = vmatprep.subr.mxu0 0.0
        %1513 = vmatpush1.msra.mxu0 0.0
        %1514 = vmatprep.subr.mxu0 0.0
        %1515 = vmatpush1.msra.mxu0 0.0
        %1516 = vmatprep.subr.mxu0 0.0
        %1517 = vmatpush1.msra.mxu0 0.0
        %1518 = vmatprep.subr.mxu0 0.0
        %1519 = vmatpush1.msra.mxu0 0.0
        %1520 = vmatprep.subr.mxu0 0.0
        %1521 = vmatpush1.msra.mxu0 0.0
        %1522 = vmatprep.subr.mxu0 0.0
        %1523 = vmatpush1.msra.mxu0 0.0
        %1524 = vmatprep.subr.mxu0 0.0
        %1525 = vmatpush1.msra.mxu0 0.0
        %1526 = vmatprep.subr.mxu0 0.0
        %1527 = vmatpush1.msra.mxu0 0.0
        %1528 = vmatprep.subr.mxu0 0.0
        %1529 = vmatpush1.msra.mxu0 0.0
        %1530 = vmatprep.subr.mxu0 0.0
        %1531 = vmatpush1.msra.mxu0 0.0
        %1532 = vmatprep.subr.mxu0 0.0
        %1533 = vmatpush1.msra.mxu0 0.0
        %1534 = vmatprep.subr.mxu0 0.0
        %1535 = vmatpush1.msra.mxu0 0.0
        %1536 = vmatprep.subr.mxu0 0.0
        %1537 = vmatpush1.msra.mxu0 0.0
        %1538 = vmatprep.subr.mxu0 0.0
        %1539 = vmatpush1.msra.mxu0 0.0
        %1540 = vmatprep.subr.mxu0 0.0
        %1541 = vmatpush1.msra.mxu0 0.0
        %1542 = vmatprep.subr.mxu0 0.0
        %1543 = vmatpush1.msra.mxu0 0.0
        %1544 = vmatprep.subr.mxu0 0.0
        %1545 = vmatpush1.msra.mxu0 0.0
        %1546 = vmatprep.subr.mxu0 0.0
        %1547 = vmatpush1.msra.mxu0 0.0
        %1548 = vmatprep.subr.mxu0 0.0
        %1549 = vmatpush1.msra.mxu0 0.0
        %1550 = vmatprep.subr.mxu0 0.0
        %1551 = vmatpush1.msra.mxu0 0.0
        %1552 = vmatprep.subr.mxu0 0.0
        %1553 = vmatpush1.msra.mxu0 0.0
        %1554 = vmatprep.subr.mxu0 0.0
        %1555 = vmatpush1.msra.mxu0 0.0
        %1556 = vmatprep.mubr.f32.mxu0 0.0
        %1557 = vmatmul.mubr.f32.gmra.mrb[0].mxu0 %v1490
        %v1558 = vpop.f32.mrb[0].mxu0
        %v1559 = vadd.f32 %v1482, %v1558
        %v1560 = vpop.f32.mrb[0].mxu0
        %1561 = vdwg.mxu0
        %v1562 = vmul.f32 %v1188, %v1207
        %v1564 = vsel %vm779, %v1562, 0
        %1566 = vmatprep.subr.mxu0 0.0
        %1567 = vmatpush1.xpose.msra.mxu0 %v1220
        %1568 = vmatprep.subr.mxu0 0.0
        %1569 = vmatpush1.xpose.msra.mxu0 0.0
        %1570 = vmatprep.subr.mxu0 0.0
        %1571 = vmatpush1.xpose.msra.mxu0 0.0
        %1572 = vmatprep.subr.mxu0 0.0
        %1573 = vmatpush1.xpose.msra.mxu0 0.0
        %1574 = vmatprep.subr.mxu0 0.0
        %1575 = vmatpush1.xpose.msra.mxu0 0.0
        %1576 = vmatprep.subr.mxu0 0.0
        %1577 = vmatpush1.xpose.msra.mxu0 0.0
        %1578 = vmatprep.subr.mxu0 0.0
        %1579 = vmatpush1.xpose.msra.mxu0 0.0
        %1580 = vmatprep.subr.mxu0 0.0
        %1581 = vmatpush1.xpose.msra.mxu0 0.0
        %1582 = vmatprep.subr.mxu0 0.0
        %1583 = vmatpush1.xpose.msra.mxu0 0.0
        %1584 = vmatprep.subr.mxu0 0.0
        %1585 = vmatpush1.xpose.msra.mxu0 0.0
        %1586 = vmatprep.subr.mxu0 0.0
        %1587 = vmatpush1.xpose.msra.mxu0 0.0
        %1588 = vmatprep.subr.mxu0 0.0
        %1589 = vmatpush1.xpose.msra.mxu0 0.0
        %1590 = vmatprep.subr.mxu0 0.0
        %1591 = vmatpush1.xpose.msra.mxu0 0.0
        %1592 = vmatprep.subr.mxu0 0.0
        %1593 = vmatpush1.xpose.msra.mxu0 0.0
        %1594 = vmatprep.subr.mxu0 0.0
        %1595 = vmatpush1.xpose.msra.mxu0 0.0
        %1596 = vmatprep.subr.mxu0 0.0
        %1597 = vmatpush1.xpose.msra.mxu0 0.0
        %1598 = vmatprep.subr.mxu0 0.0
        %1599 = vmatpush1.xpose.msra.mxu0 0.0
        %1600 = vmatprep.subr.mxu0 0.0
        %1601 = vmatpush1.xpose.msra.mxu0 0.0
        %1602 = vmatprep.subr.mxu0 0.0
        %1603 = vmatpush1.xpose.msra.mxu0 0.0
        %1604 = vmatprep.subr.mxu0 0.0
        %1605 = vmatpush1.xpose.msra.mxu0 0.0
        %1606 = vmatprep.subr.mxu0 0.0
        %1607 = vmatpush1.xpose.msra.mxu0 0.0
        %1608 = vmatprep.subr.mxu0 0.0
        %1609 = vmatpush1.xpose.msra.mxu0 0.0
        %1610 = vmatprep.subr.mxu0 0.0
        %1611 = vmatpush1.xpose.msra.mxu0 0.0
        %1612 = vmatprep.subr.mxu0 0.0
        %1613 = vmatpush1.xpose.msra.mxu0 0.0
        %1614 = vmatprep.subr.mxu0 0.0
        %1615 = vmatpush1.xpose.msra.mxu0 0.0
        %1616 = vmatprep.subr.mxu0 0.0
        %1617 = vmatpush1.xpose.msra.mxu0 0.0
        %1618 = vmatprep.subr.mxu0 0.0
        %1619 = vmatpush1.xpose.msra.mxu0 0.0
        %1620 = vmatprep.subr.mxu0 0.0
        %1621 = vmatpush1.xpose.msra.mxu0 0.0
        %1622 = vmatprep.subr.mxu0 0.0
        %1623 = vmatpush1.xpose.msra.mxu0 0.0
        %1624 = vmatprep.subr.mxu0 0.0
        %1625 = vmatpush1.xpose.msra.mxu0 0.0
        %1626 = vmatprep.subr.mxu0 0.0
        %1627 = vmatpush1.xpose.msra.mxu0 0.0
        %1628 = vmatprep.subr.mxu0 0.0
        %1629 = vmatpush1.xpose.msra.mxu0 0.0
        %1630 = vmatprep.mubr.f32.mxu0 0.0
        %1631 = vmatmul.mubr.f32.gmra.mrb[0].mxu0 %v1564
        %v1632 = vpop.f32.mrb[0].mxu0
        %v1633 = vadd.f32 0.0, %v1632
        %v1634 = vpop.f32.mrb[0].mxu0
        %1635 = vdwg.mxu0
        %v1636 = vmul.f32 %v1633, 0.35355338
        %v1637 = vadd.f32 %v1636, %v1297
        %v1638 = vsel %vm635, %v1637, -inf
        %1639 = vmax.xlane.f32.xlu0 %v1638
        %v1640 = vpop.xlane.xlu0 %1639
        %v1641 = vsub.f32 %v1637, %v1640
        %v1642 = vmul.f32 %v1641, 1.442695
        %v1643 = vpow.pop %v1642
        %v1644 = vsel %vm635, %v1643, 0.0
        %1645 = vadd.xlane.f32.xlu0 %v1644
        %v1646 = vpop.xlane.xlu0 %1645
        %v1647 = vrcp.pop %v1646
        %v1648 = vmul.f32 %v1643, %v1647
        %1650 = vrot.lane.b32.xlu0 %v1207, 64
        %v1651 = vpop.permute.xlu0 %1650
        %v1653 = vmul.f32 %v1188, %v1651
        %1655 = vrot.lane.b32.xlu0 %v1653, 64
        %v1656 = vpop.permute.xlu0 %1655
        %v1659 = vsel %vm635, %v1648, 0
        %1661 = vmatprep.subr.mxu0 0.0
        %1662 = vmatpush1.msra.mxu0 %v1656
        %1663 = vmatprep.subr.mxu0 0.0
        %1664 = vmatpush1.msra.mxu0 0.0
        %1665 = vmatprep.subr.mxu0 0.0
        %1666 = vmatpush1.msra.mxu0 0.0
        %1667 = vmatprep.subr.mxu0 0.0
        %1668 = vmatpush1.msra.mxu0 0.0
        %1669 = vmatprep.subr.mxu0 0.0
        %1670 = vmatpush1.msra.mxu0 0.0
        %1671 = vmatprep.subr.mxu0 0.0
        %1672 = vmatpush1.msra.mxu0 0.0
        %1673 = vmatprep.subr.mxu0 0.0
        %1674 = vmatpush1.msra.mxu0 0.0
        %1675 = vmatprep.subr.mxu0 0.0
        %1676 = vmatpush1.msra.mxu0 0.0
        %1677 = vmatprep.subr.mxu0 0.0
        %1678 = vmatpush1.msra.mxu0 0.0
        %1679 = vmatprep.subr.mxu0 0.0
        %1680 = vmatpush1.msra.mxu0 0.0
        %1681 = vmatprep.subr.mxu0 0.0
        %1682 = vmatpush1.msra.mxu0 0.0
        %1683 = vmatprep.subr.mxu0 0.0
        %1684 = vmatpush1.msra.mxu0 0.0
        %1685 = vmatprep.subr.mxu0 0.0
        %1686 = vmatpush1.msra.mxu0 0.0
        %1687 = vmatprep.subr.mxu0 0.0
        %1688 = vmatpush1.msra.mxu0 0.0
        %1689 = vmatprep.subr.mxu0 0.0
        %1690 = vmatpush1.msra.mxu0 0.0
        %1691 = vmatprep.subr.mxu0 0.0
        %1692 = vmatpush1.msra.mxu0 0.0
        %1693 = vmatprep.subr.mxu0 0.0
        %1694 = vmatpush1.msra.mxu0 0.0
        %1695 = vmatprep.subr.mxu0 0.0
        %1696 = vmatpush1.msra.mxu0 0.0
        %1697 = vmatprep.subr.mxu0 0.0
        %1698 = vmatpush1.msra.mxu0 0.0
        %1699 = vmatprep.subr.mxu0 0.0
        %1700 = vmatpush1.msra.mxu0 0.0
        %1701 = vmatprep.subr.mxu0 0.0
        %1702 = vmatpush1.msra.mxu0 0.0
        %1703 = vmatprep.subr.mxu0 0.0
        %1704 = vmatpush1.msra.mxu0 0.0
        %1705 = vmatprep.subr.mxu0 0.0
        %1706 = vmatpush1.msra.mxu0 0.0
        %1707 = vmatprep.subr.mxu0 0.0
        %1708 = vmatpush1.msra.mxu0 0.0
        %1709 = vmatprep.subr.mxu0 0.0
        %1710 = vmatpush1.msra.mxu0 0.0
        %1711 = vmatprep.subr.mxu0 0.0
        %1712 = vmatpush1.msra.mxu0 0.0
        %1713 = vmatprep.subr.mxu0 0.0
        %1714 = vmatpush1.msra.mxu0 0.0
        %1715 = vmatprep.subr.mxu0 0.0
        %1716 = vmatpush1.msra.mxu0 0.0
        %1717 = vmatprep.subr.mxu0 0.0
        %1718 = vmatpush1.msra.mxu0 0.0
        %1719 = vmatprep.subr.mxu0 0.0
        %1720 = vmatpush1.msra.mxu0 0.0
        %1721 = vmatprep.subr.mxu0 0.0
        %1722 = vmatpush1.msra.mxu0 0.0
        %1723 = vmatprep.subr.mxu0 0.0
        %1724 = vmatpush1.msra.mxu0 0.0
        %1725 = vmatprep.mubr.f32.mxu0 0.0
        %1726 = vmatmul.mubr.f32.gmra.mrb[0].mxu0 %v1659
        %v1727 = vpop.f32.mrb[0].mxu0
        %v1728 = vadd.f32 0.0, %v1727
        %v1729 = vpop.f32.mrb[0].mxu0
        %1730 = vdwg.mxu0
        %v1731 = vadd.f32 %v1559, %v1728
        %v1732 = vmul.f32 %v1188, %v1212
        %v1734 = vsel %vm779, %v1732, 0
        %1736 = vmatprep.subr.mxu0 0.0
        %1737 = vmatpush1.xpose.msra.mxu0 %v1220
        %1738 = vmatprep.subr.mxu0 0.0
        %1739 = vmatpush1.xpose.msra.mxu0 0.0
        %1740 = vmatprep.subr.mxu0 0.0
        %1741 = vmatpush1.xpose.msra.mxu0 0.0
        %1742 = vmatprep.subr.mxu0 0.0
        %1743 = vmatpush1.xpose.msra.mxu0 0.0
        %1744 = vmatprep.subr.mxu0 0.0
        %1745 = vmatpush1.xpose.msra.mxu0 0.0
        %1746 = vmatprep.subr.mxu0 0.0
        %1747 = vmatpush1.xpose.msra.mxu0 0.0
        %1748 = vmatprep.subr.mxu0 0.0
        %1749 = vmatpush1.xpose.msra.mxu0 0.0
        %1750 = vmatprep.subr.mxu0 0.0
        %1751 = vmatpush1.xpose.msra.mxu0 0.0
        %1752 = vmatprep.subr.mxu0 0.0
        %1753 = vmatpush1.xpose.msra.mxu0 0.0
        %1754 = vmatprep.subr.mxu0 0.0
        %1755 = vmatpush1.xpose.msra.mxu0 0.0
        %1756 = vmatprep.subr.mxu0 0.0
        %1757 = vmatpush1.xpose.msra.mxu0 0.0
        %1758 = vmatprep.subr.mxu0 0.0
        %1759 = vmatpush1.xpose.msra.mxu0 0.0
        %1760 = vmatprep.subr.mxu0 0.0
        %1761 = vmatpush1.xpose.msra.mxu0 0.0
        %1762 = vmatprep.subr.mxu0 0.0
        %1763 = vmatpush1.xpose.msra.mxu0 0.0
        %1764 = vmatprep.subr.mxu0 0.0
        %1765 = vmatpush1.xpose.msra.mxu0 0.0
        %1766 = vmatprep.subr.mxu0 0.0
        %1767 = vmatpush1.xpose.msra.mxu0 0.0
        %1768 = vmatprep.subr.mxu0 0.0
        %1769 = vmatpush1.xpose.msra.mxu0 0.0
        %1770 = vmatprep.subr.mxu0 0.0
        %1771 = vmatpush1.xpose.msra.mxu0 0.0
        %1772 = vmatprep.subr.mxu0 0.0
        %1773 = vmatpush1.xpose.msra.mxu0 0.0
        %1774 = vmatprep.subr.mxu0 0.0
        %1775 = vmatpush1.xpose.msra.mxu0 0.0
        %1776 = vmatprep.subr.mxu0 0.0
        %1777 = vmatpush1.xpose.msra.mxu0 0.0
        %1778 = vmatprep.subr.mxu0 0.0
        %1779 = vmatpush1.xpose.msra.mxu0 0.0
        %1780 = vmatprep.subr.mxu0 0.0
        %1781 = vmatpush1.xpose.msra.mxu0 0.0
        %1782 = vmatprep.subr.mxu0 0.0
        %1783 = vmatpush1.xpose.msra.mxu0 0.0
        %1784 = vmatprep.subr.mxu0 0.0
        %1785 = vmatpush1.xpose.msra.mxu0 0.0
        %1786 = vmatprep.subr.mxu0 0.0
        %1787 = vmatpush1.xpose.msra.mxu0 0.0
        %1788 = vmatprep.subr.mxu0 0.0
        %1789 = vmatpush1.xpose.msra.mxu0 0.0
        %1790 = vmatprep.subr.mxu0 0.0
        %1791 = vmatpush1.xpose.msra.mxu0 0.0
        %1792 = vmatprep.subr.mxu0 0.0
        %1793 = vmatpush1.xpose.msra.mxu0 0.0
        %1794 = vmatprep.subr.mxu0 0.0
        %1795 = vmatpush1.xpose.msra.mxu0 0.0
        %1796 = vmatprep.subr.mxu0 0.0
        %1797 = vmatpush1.xpose.msra.mxu0 0.0
        %1798 = vmatprep.subr.mxu0 0.0
        %1799 = vmatpush1.xpose.msra.mxu0 0.0
        %1800 = vmatprep.mubr.f32.mxu0 0.0
        %1801 = vmatmul.mubr.f32.gmra.mrb[0].mxu0 %v1734
        %v1802 = vpop.f32.mrb[0].mxu0
        %v1803 = vadd.f32 0.0, %v1802
        %v1804 = vpop.f32.mrb[0].mxu0
        %1805 = vdwg.mxu0
        %v1806 = vmul.f32 %v1803, 0.35355338
        %v1807 = vadd.f32 %v1806, %v1297
        %v1808 = vsel %vm635, %v1807, -inf
        %1809 = vmax.xlane.f32.xlu0 %v1808
        %v1810 = vpop.xlane.xlu0 %1809
        %v1811 = vsub.f32 %v1807, %v1810
        %v1812 = vmul.f32 %v1811, 1.442695
        %v1813 = vpow.pop %v1812
        %v1814 = vsel %vm635, %v1813, 0.0
        %1815 = vadd.xlane.f32.xlu0 %v1814
        %v1816 = vpop.xlane.xlu0 %1815
        %v1817 = vrcp.pop %v1816
        %v1818 = vmul.f32 %v1813, %v1817
        %1820 = vrot.lane.b32.xlu0 %v1212, 64
        %v1821 = vpop.permute.xlu0 %1820
        %v1823 = vmul.f32 %v1188, %v1821
        %1825 = vrot.lane.b32.xlu0 %v1823, 64
        %v1826 = vpop.permute.xlu0 %1825
        %v1829 = vsel %vm635, %v1818, 0
        %1831 = vmatprep.subr.mxu0 0.0
        %1832 = vmatpush1.msra.mxu0 %v1826
        %1833 = vmatprep.subr.mxu0 0.0
        %1834 = vmatpush1.msra.mxu0 0.0
        %1835 = vmatprep.subr.mxu0 0.0
        %1836 = vmatpush1.msra.mxu0 0.0
        %1837 = vmatprep.subr.mxu0 0.0
        %1838 = vmatpush1.msra.mxu0 0.0
        %1839 = vmatprep.subr.mxu0 0.0
        %1840 = vmatpush1.msra.mxu0 0.0
        %1841 = vmatprep.subr.mxu0 0.0
        %1842 = vmatpush1.msra.mxu0 0.0
        %1843 = vmatprep.subr.mxu0 0.0
        %1844 = vmatpush1.msra.mxu0 0.0
        %1845 = vmatprep.subr.mxu0 0.0
        %1846 = vmatpush1.msra.mxu0 0.0
        %1847 = vmatprep.subr.mxu0 0.0
        %1848 = vmatpush1.msra.mxu0 0.0
        %1849 = vmatprep.subr.mxu0 0.0
        %1850 = vmatpush1.msra.mxu0 0.0
        %1851 = vmatprep.subr.mxu0 0.0
        %1852 = vmatpush1.msra.mxu0 0.0
        %1853 = vmatprep.subr.mxu0 0.0
        %1854 = vmatpush1.msra.mxu0 0.0
        %1855 = vmatprep.subr.mxu0 0.0
        %1856 = vmatpush1.msra.mxu0 0.0
        %1857 = vmatprep.subr.mxu0 0.0
        %1858 = vmatpush1.msra.mxu0 0.0
        %1859 = vmatprep.subr.mxu0 0.0
        %1860 = vmatpush1.msra.mxu0 0.0
        %1861 = vmatprep.subr.mxu0 0.0
        %1862 = vmatpush1.msra.mxu0 0.0
        %1863 = vmatprep.subr.mxu0 0.0
        %1864 = vmatpush1.msra.mxu0 0.0
        %1865 = vmatprep.subr.mxu0 0.0
        %1866 = vmatpush1.msra.mxu0 0.0
        %1867 = vmatprep.subr.mxu0 0.0
        %1868 = vmatpush1.msra.mxu0 0.0
        %1869 = vmatprep.subr.mxu0 0.0
        %1870 = vmatpush1.msra.mxu0 0.0
        %1871 = vmatprep.subr.mxu0 0.0
        %1872 = vmatpush1.msra.mxu0 0.0
        %1873 = vmatprep.subr.mxu0 0.0
        %1874 = vmatpush1.msra.mxu0 0.0
        %1875 = vmatprep.subr.mxu0 0.0
        %1876 = vmatpush1.msra.mxu0 0.0
        %1877 = vmatprep.subr.mxu0 0.0
        %1878 = vmatpush1.msra.mxu0 0.0
        %1879 = vmatprep.subr.mxu0 0.0
        %1880 = vmatpush1.msra.mxu0 0.0
        %1881 = vmatprep.subr.mxu0 0.0
        %1882 = vmatpush1.msra.mxu0 0.0
        %1883 = vmatprep.subr.mxu0 0.0
        %1884 = vmatpush1.msra.mxu0 0.0
        %1885 = vmatprep.subr.mxu0 0.0
        %1886 = vmatpush1.msra.mxu0 0.0
        %1887 = vmatprep.subr.mxu0 0.0
        %1888 = vmatpush1.msra.mxu0 0.0
        %1889 = vmatprep.subr.mxu0 0.0
        %1890 = vmatpush1.msra.mxu0 0.0
        %1891 = vmatprep.subr.mxu0 0.0
        %1892 = vmatpush1.msra.mxu0 0.0
        %1893 = vmatprep.subr.mxu0 0.0
        %1894 = vmatpush1.msra.mxu0 0.0
        %1895 = vmatprep.mubr.f32.mxu0 0.0
        %1896 = vmatmul.mubr.f32.gmra.mrb[0].mxu0 %v1829
        %v1897 = vpop.f32.mrb[0].mxu0
        %v1898 = vadd.f32 0.0, %v1897
        %v1899 = vpop.f32.mrb[0].mxu0
        %1900 = vdwg.mxu0
        %v1901 = vadd.f32 %v1731, %v1898
        %v1902 = vld [vmem:[#allocation13 + $0x40] sm:$0xff]
        %v1903 = vld [vmem:[#allocation13 + $0x48] sm:$0xff]
        %v1904 = vld [vmem:[#allocation13 + $0x50] sm:$0xff]
        %v1905 = vld [vmem:[#allocation13 + $0x58] sm:$0xff]
        %v1906 = vld [vmem:[#allocation13 + $0xe3] sm:$0x1]
        %v1907 = vlaneseq
        %v1908 = vshrl.u32 %v1907, 7
        %v1909 = vsub.s32 0, %v1908
        %v1910 = vrot.slane %v1906, %v1909
        %v1912 = vsel %vm779, %v1901, 0
        %1914 = vmatprep.subr.mxu0 0.0
        %1915 = vmatpush1.msra.mxu0 %v1902
        %1916 = vmatprep.subr.mxu0 0.0
        %1917 = vmatpush1.msra.mxu0 %v1903
        %1918 = vmatprep.subr.mxu0 0.0
        %1919 = vmatpush1.msra.mxu0 %v1904
        %1920 = vmatprep.subr.mxu0 0.0
        %1921 = vmatpush1.msra.mxu0 %v1905
        %1922 = vmatprep.subr.mxu0 0.0
        %1923 = vmatpush1.msra.mxu0 0.0
        %1924 = vmatprep.subr.mxu0 0.0
        %1925 = vmatpush1.msra.mxu0 0.0
        %1926 = vmatprep.subr.mxu0 0.0
        %1927 = vmatpush1.msra.mxu0 0.0
        %1928 = vmatprep.subr.mxu0 0.0
        %1929 = vmatpush1.msra.mxu0 0.0
        %1930 = vmatprep.subr.mxu0 0.0
        %1931 = vmatpush1.msra.mxu0 0.0
        %1932 = vmatprep.subr.mxu0 0.0
        %1933 = vmatpush1.msra.mxu0 0.0
        %1934 = vmatprep.subr.mxu0 0.0
        %1935 = vmatpush1.msra.mxu0 0.0
        %1936 = vmatprep.subr.mxu0 0.0
        %1937 = vmatpush1.msra.mxu0 0.0
        %1938 = vmatprep.subr.mxu0 0.0
        %1939 = vmatpush1.msra.mxu0 0.0
        %1940 = vmatprep.subr.mxu0 0.0
        %1941 = vmatpush1.msra.mxu0 0.0
        %1942 = vmatprep.subr.mxu0 0.0
        %1943 = vmatpush1.msra.mxu0 0.0
        %1944 = vmatprep.subr.mxu0 0.0
        %1945 = vmatpush1.msra.mxu0 0.0
        %1946 = vmatprep.subr.mxu0 0.0
        %1947 = vmatpush1.msra.mxu0 0.0
        %1948 = vmatprep.subr.mxu0 0.0
        %1949 = vmatpush1.msra.mxu0 0.0
        %1950 = vmatprep.subr.mxu0 0.0
        %1951 = vmatpush1.msra.mxu0 0.0
        %1952 = vmatprep.subr.mxu0 0.0
        %1953 = vmatpush1.msra.mxu0 0.0
        %1954 = vmatprep.subr.mxu0 0.0
        %1955 = vmatpush1.msra.mxu0 0.0
        %1956 = vmatprep.subr.mxu0 0.0
        %1957 = vmatpush1.msra.mxu0 0.0
        %1958 = vmatprep.subr.mxu0 0.0
        %1959 = vmatpush1.msra.mxu0 0.0
        %1960 = vmatprep.subr.mxu0 0.0
        %1961 = vmatpush1.msra.mxu0 0.0
        %1962 = vmatprep.subr.mxu0 0.0
        %1963 = vmatpush1.msra.mxu0 0.0
        %1964 = vmatprep.subr.mxu0 0.0
        %1965 = vmatpush1.msra.mxu0 0.0
        %1966 = vmatprep.subr.mxu0 0.0
        %1967 = vmatpush1.msra.mxu0 0.0
        %1968 = vmatprep.subr.mxu0 0.0
        %1969 = vmatpush1.msra.mxu0 0.0
        %1970 = vmatprep.subr.mxu0 0.0
        %1971 = vmatpush1.msra.mxu0 0.0
        %1972 = vmatprep.subr.mxu0 0.0
        %1973 = vmatpush1.msra.mxu0 0.0
        %1974 = vmatprep.subr.mxu0 0.0
        %1975 = vmatpush1.msra.mxu0 0.0
        %1976 = vmatprep.subr.mxu0 0.0
        %1977 = vmatpush1.msra.mxu0 0.0
        %1978 = vmatprep.mubr.f32.mxu0 0.0
        %1979 = vmatmul.mubr.f32.gmra.mrb[0].mxu0 %v1912
        %v1980 = vpop.f32.mrb[0].mxu0
        %v1981 = vadd.f32 %v1910, %v1980
        %v1982 = vpop.f32.mrb[0].mxu0
        %1983 = vdwg.mxu0
        %v1984 = vadd.f32 %v1106, %v1981
        %v1985 = vld [vmem:[#allocation13 + $0xe4] sm:$0x1]
        %v1986 = vld [vmem:[#allocation13 + $0xe5] sm:$0x1]
        %v1987 = vsel %vm779, %v1984, 0.0
        %1988 = vadd.xlane.f32.xlu0 %v1987
        %v1989 = vpop.xlane.xlu0 %1988
        %v1990 = vmul.f32 %v1989, %v1086
        %v1991 = vsub.f32 %v1984, %v1990
        %v1992 = vmul.f32 %v1991, %v1991
        %v1993 = vsel %vm779, %v1992, 0.0
        %1994 = vadd.xlane.f32.xlu0 %v1993
        %v1995 = vpop.xlane.xlu0 %1994
        %v1996 = vmul.f32 %v1995, %v1086
        %v1997 = vadd.f32 %v1996, 1e-05
        %v1998 = vrsqrt.pop %v1997
        %v1999 = vmul.f32 %v1991, %v1998
        %v2000 = vlaneseq
        %v2001 = vshrl.u32 %v2000, 7
        %v2002 = vsub.s32 0, %v2001
        %v2003 = vrot.slane %v1985, %v2002
        %v2004 = vmul.f32 %v1999, %v2003
        %v2005 = vlaneseq
        %v2006 = vshrl.u32 %v2005, 7
        %v2007 = vsub.s32 0, %v2006
        %v2008 = vrot.slane %v1986, %v2007
        %v2009 = vadd.f32 %v2004, %v2008
        %v2010 = vld [vmem:[#allocation16] sm:$0xff]
        %v2011 = vld [vmem:[#allocation16 + $0x8] sm:$0xff]
        %v2012 = vld [vmem:[#allocation16 + $0x10] sm:$0xff]
        %v2013 = vld [vmem:[#allocation16 + $0x18] sm:$0xff]
        %v2014 = vld [vmem:[#allocation16 + $0x20] sm:$0x1]
        %v2015 = vlaneseq
        %v2016 = vshrl.u32 %v2015, 7
        %v2017 = vsub.s32 0, %v2016
        %v2018 = vrot.slane %v2014, %v2017
        %v2020 = vsel %vm779, %v2009, 0
        %2022 = vmatprep.subr.mxu0 0.0
        %2023 = vmatpush1.msra.mxu0 %v2010
        %2024 = vmatprep.subr.mxu0 0.0
        %2025 = vmatpush1.msra.mxu0 %v2011
        %2026 = vmatprep.subr.mxu0 0.0
        %2027 = vmatpush1.msra.mxu0 %v2012
        %2028 = vmatprep.subr.mxu0 0.0
        %2029 = vmatpush1.msra.mxu0 %v2013
        %2030 = vmatprep.subr.mxu0 0.0
        %2031 = vmatpush1.msra.mxu0 0.0
        %2032 = vmatprep.subr.mxu0 0.0
        %2033 = vmatpush1.msra.mxu0 0.0
        %2034 = vmatprep.subr.mxu0 0.0
        %2035 = vmatpush1.msra.mxu0 0.0
        %2036 = vmatprep.subr.mxu0 0.0
        %2037 = vmatpush1.msra.mxu0 0.0
        %2038 = vmatprep.subr.mxu0 0.0
        %2039 = vmatpush1.msra.mxu0 0.0
        %2040 = vmatprep.subr.mxu0 0.0
        %2041 = vmatpush1.msra.mxu0 0.0
        %2042 = vmatprep.subr.mxu0 0.0
        %2043 = vmatpush1.msra.mxu0 0.0
        %2044 = vmatprep.subr.mxu0 0.0
        %2045 = vmatpush1.msra.mxu0 0.0
        %2046 = vmatprep.subr.mxu0 0.0
        %2047 = vmatpush1.msra.mxu0 0.0
        %2048 = vmatprep.subr.mxu0 0.0
        %2049 = vmatpush1.msra.mxu0 0.0
        %2050 = vmatprep.subr.mxu0 0.0
        %2051 = vmatpush1.msra.mxu0 0.0
        %2052 = vmatprep.subr.mxu0 0.0
        %2053 = vmatpush1.msra.mxu0 0.0
        %2054 = vmatprep.subr.mxu0 0.0
        %2055 = vmatpush1.msra.mxu0 0.0
        %2056 = vmatprep.subr.mxu0 0.0
        %2057 = vmatpush1.msra.mxu0 0.0
        %2058 = vmatprep.subr.mxu0 0.0
        %2059 = vmatpush1.msra.mxu0 0.0
        %2060 = vmatprep.subr.mxu0 0.0
        %2061 = vmatpush1.msra.mxu0 0.0
        %2062 = vmatprep.subr.mxu0 0.0
        %2063 = vmatpush1.msra.mxu0 0.0
        %2064 = vmatprep.subr.mxu0 0.0
        %2065 = vmatpush1.msra.mxu0 0.0
        %2066 = vmatprep.subr.mxu0 0.0
        %2067 = vmatpush1.msra.mxu0 0.0
        %2068 = vmatprep.subr.mxu0 0.0
        %2069 = vmatpush1.msra.mxu0 0.0
        %2070 = vmatprep.subr.mxu0 0.0
        %2071 = vmatpush1.msra.mxu0 0.0
        %2072 = vmatprep.subr.mxu0 0.0
        %2073 = vmatpush1.msra.mxu0 0.0
        %2074 = vmatprep.subr.mxu0 0.0
        %2075 = vmatpush1.msra.mxu0 0.0
        %2076 = vmatprep.subr.mxu0 0.0
        %2077 = vmatpush1.msra.mxu0 0.0
        %2078 = vmatprep.subr.mxu0 0.0
        %2079 = vmatpush1.msra.mxu0 0.0
        %2080 = vmatprep.subr.mxu0 0.0
        %2081 = vmatpush1.msra.mxu0 0.0
        %2082 = vmatprep.subr.mxu0 0.0
        %2083 = vmatpush1.msra.mxu0 0.0
        %2084 = vmatprep.subr.mxu0 0.0
        %2085 = vmatpush1.msra.mxu0 0.0
        %2086 = vmatprep.mubr.f32.mxu0 0.0
        %2087 = vmatmul.mubr.f32.gmra.mrb[0].mxu0 %v2020
        %v2088 = vpop.f32.mrb[0].mxu0
        %v2089 = vadd.f32 %v2018, %v2088
        %v2090 = vpop.f32.mrb[0].mxu0
        %2091 = vdwg.mxu0
        %v2092 = vmax.f32 %v2089, 0.0
        %v2093 = vld [vmem:[#allocation13 + $0x60] sm:$0xff]
        %v2094 = vld [vmem:[#allocation13 + $0x68] sm:$0xff]
        %v2095 = vld [vmem:[#allocation13 + $0x70] sm:$0xff]
        %v2096 = vld [vmem:[#allocation13 + $0x78] sm:$0xff]
        %v2097 = vld [vmem:[#allocation13 + $0x80] sm:$0xff]
        %v2098 = vld [vmem:[#allocation13 + $0x88] sm:$0xff]
        %v2099 = vld [vmem:[#allocation13 + $0x90] sm:$0xff]
        %v2100 = vld [vmem:[#allocation13 + $0x98] sm:$0xff]
        %v2101 = vld [vmem:[#allocation13 + $0xa0] sm:$0xff]
        %v2102 = vld [vmem:[#allocation13 + $0xa8] sm:$0xff]
        %v2103 = vld [vmem:[#allocation13 + $0xb0] sm:$0xff]
        %v2104 = vld [vmem:[#allocation13 + $0xb8] sm:$0xff]
        %v2105 = vld [vmem:[#allocation13 + $0xc0] sm:$0xff]
        %v2106 = vld [vmem:[#allocation13 + $0xc8] sm:$0xff]
        %v2107 = vld [vmem:[#allocation13 + $0xd0] sm:$0xff]
        %v2108 = vld [vmem:[#allocation13 + $0xd8] sm:$0xff]
        %v2109 = vld [vmem:[#allocation13 + $0xe6] sm:$0x1]
        %v2110 = vlaneseq
        %v2111 = vshrl.u32 %v2110, 7
        %v2112 = vsub.s32 0, %v2111
        %v2113 = vrot.slane %v2109, %v2112
        %2114 = vmatprep.subr.mxu0 0.0
        %2115 = vmatpush1.msra.mxu0 %v2093
        %2116 = vmatprep.subr.mxu0 0.0
        %2117 = vmatpush1.msra.mxu0 %v2094
        %2118 = vmatprep.subr.mxu0 0.0
        %2119 = vmatpush1.msra.mxu0 %v2095
        %2120 = vmatprep.subr.mxu0 0.0
        %2121 = vmatpush1.msra.mxu0 %v2096
        %2122 = vmatprep.subr.mxu0 0.0
        %2123 = vmatpush1.msra.mxu0 %v2097
        %2124 = vmatprep.subr.mxu0 0.0
        %2125 = vmatpush1.msra.mxu0 %v2098
        %2126 = vmatprep.subr.mxu0 0.0
        %2127 = vmatpush1.msra.mxu0 %v2099
        %2128 = vmatprep.subr.mxu0 0.0
        %2129 = vmatpush1.msra.mxu0 %v2100
        %2130 = vmatprep.subr.mxu0 0.0
        %2131 = vmatpush1.msra.mxu0 %v2101
        %2132 = vmatprep.subr.mxu0 0.0
        %2133 = vmatpush1.msra.mxu0 %v2102
        %2134 = vmatprep.subr.mxu0 0.0
        %2135 = vmatpush1.msra.mxu0 %v2103
        %2136 = vmatprep.subr.mxu0 0.0
        %2137 = vmatpush1.msra.mxu0 %v2104
        %2138 = vmatprep.subr.mxu0 0.0
        %2139 = vmatpush1.msra.mxu0 %v2105
        %2140 = vmatprep.subr.mxu0 0.0
        %2141 = vmatpush1.msra.mxu0 %v2106
        %2142 = vmatprep.subr.mxu0 0.0
        %2143 = vmatpush1.msra.mxu0 %v2107
        %2144 = vmatprep.subr.mxu0 0.0
        %2145 = vmatpush1.msra.mxu0 %v2108
        %2146 = vmatprep.subr.mxu0 0.0
        %2147 = vmatpush1.msra.mxu0 0.0
        %2148 = vmatprep.subr.mxu0 0.0
        %2149 = vmatpush1.msra.mxu0 0.0
        %2150 = vmatprep.subr.mxu0 0.0
        %2151 = vmatpush1.msra.mxu0 0.0
        %2152 = vmatprep.subr.mxu0 0.0
        %2153 = vmatpush1.msra.mxu0 0.0
        %2154 = vmatprep.subr.mxu0 0.0
        %2155 = vmatpush1.msra.mxu0 0.0
        %2156 = vmatprep.subr.mxu0 0.0
        %2157 = vmatpush1.msra.mxu0 0.0
        %2158 = vmatprep.subr.mxu0 0.0
        %2159 = vmatpush1.msra.mxu0 0.0
        %2160 = vmatprep.subr.mxu0 0.0
        %2161 = vmatpush1.msra.mxu0 0.0
        %2162 = vmatprep.subr.mxu0 0.0
        %2163 = vmatpush1.msra.mxu0 0.0
        %2164 = vmatprep.subr.mxu0 0.0
        %2165 = vmatpush1.msra.mxu0 0.0
        %2166 = vmatprep.subr.mxu0 0.0
        %2167 = vmatpush1.msra.mxu0 0.0
        %2168 = vmatprep.subr.mxu0 0.0
        %2169 = vmatpush1.msra.mxu0 0.0
        %2170 = vmatprep.subr.mxu0 0.0
        %2171 = vmatpush1.msra.mxu0 0.0
        %2172 = vmatprep.subr.mxu0 0.0
        %2173 = vmatpush1.msra.mxu0 0.0
        %2174 = vmatprep.subr.mxu0 0.0
        %2175 = vmatpush1.msra.mxu0 0.0
        %2176 = vmatprep.subr.mxu0 0.0
        %2177 = vmatpush1.msra.mxu0 0.0
        %2178 = vmatprep.mubr.f32.mxu0 0.0
        %2179 = vmatmul.mubr.f32.gmra.mrb[0].mxu0 %v2092
        %v2180 = vpop.f32.mrb[0].mxu0
        %v2181 = vadd.f32 %v2113, %v2180
        %v2182 = vpop.f32.mrb[0].mxu0
        %2183 = vdwg.mxu0
        %v2184 = vadd.f32 %v2009, %v2181
        %v2185 = vld [vmem:[#allocation13 + $0xe7] sm:$0x1]
        %v2186 = vld [vmem:[#allocation13 + $0xe8] sm:$0x1]
        %v2187 = vsel %vm779, %v2184, 0.0
        %2188 = vadd.xlane.f32.xlu0 %v2187
        %v2189 = vpop.xlane.xlu0 %2188
        %v2190 = vmul.f32 %v2189, %v1086
        %v2191 = vsub.f32 %v2184, %v2190
        %v2192 = vmul.f32 %v2191, %v2191
        %v2193 = vsel %vm779, %v2192, 0.0
        %2194 = vadd.xlane.f32.xlu0 %v2193
        %v2195 = vpop.xlane.xlu0 %2194
        %v2196 = vmul.f32 %v2195, %v1086
        %v2197 = vadd.f32 %v2196, 1e-05
        %v2198 = vrsqrt.pop %v2197
        %v2199 = vmul.f32 %v2191, %v2198
        %v2200 = vlaneseq
        %v2201 = vshrl.u32 %v2200, 7
        %v2202 = vsub.s32 0, %v2201
        %v2203 = vrot.slane %v2185, %v2202
        %v2204 = vmul.f32 %v2199, %v2203
        %v2205 = vlaneseq
        %v2206 = vshrl.u32 %v2205, 7
        %v2207 = vsub.s32 0, %v2206
        %v2208 = vrot.slane %v2186, %v2207
        %v2209 = vadd.f32 %v2204, %v2208
        %v2210 = vld [vmem:[#allocation17] sm:$0xff]
        %v2211 = vld [vmem:[#allocation17 + $0x8] sm:$0xff]
        %v2212 = vld [vmem:[#allocation17 + $0x10] sm:$0xff]
        %v2213 = vld [vmem:[#allocation17 + $0x18] sm:$0xff]
        %v2214 = vld [vmem:[#allocation17 + $0x20] sm:$0x1]
        %v2215 = vlaneseq
        %v2216 = vshrl.u32 %v2215, 7
        %v2217 = vsub.s32 0, %v2216
        %v2218 = vrot.slane %v2214, %v2217
        %v2220 = vsel %vm779, %v2209, 0
        %2222 = vmatprep.subr.mxu0 0.0
        %2223 = vmatpush1.msra.mxu0 %v2210
        %2224 = vmatprep.subr.mxu0 0.0
        %2225 = vmatpush1.msra.mxu0 %v2211
        %2226 = vmatprep.subr.mxu0 0.0
        %2227 = vmatpush1.msra.mxu0 %v2212
        %2228 = vmatprep.subr.mxu0 0.0
        %2229 = vmatpush1.msra.mxu0 %v2213
        %2230 = vmatprep.subr.mxu0 0.0
        %2231 = vmatpush1.msra.mxu0 0.0
        %2232 = vmatprep.subr.mxu0 0.0
        %2233 = vmatpush1.msra.mxu0 0.0
        %2234 = vmatprep.subr.mxu0 0.0
        %2235 = vmatpush1.msra.mxu0 0.0
        %2236 = vmatprep.subr.mxu0 0.0
        %2237 = vmatpush1.msra.mxu0 0.0
        %2238 = vmatprep.subr.mxu0 0.0
        %2239 = vmatpush1.msra.mxu0 0.0
        %2240 = vmatprep.subr.mxu0 0.0
        %2241 = vmatpush1.msra.mxu0 0.0
        %2242 = vmatprep.subr.mxu0 0.0
        %2243 = vmatpush1.msra.mxu0 0.0
        %2244 = vmatprep.subr.mxu0 0.0
        %2245 = vmatpush1.msra.mxu0 0.0
        %2246 = vmatprep.subr.mxu0 0.0
        %2247 = vmatpush1.msra.mxu0 0.0
        %2248 = vmatprep.subr.mxu0 0.0
        %2249 = vmatpush1.msra.mxu0 0.0
        %2250 = vmatprep.subr.mxu0 0.0
        %2251 = vmatpush1.msra.mxu0 0.0
        %2252 = vmatprep.subr.mxu0 0.0
        %2253 = vmatpush1.msra.mxu0 0.0
        %2254 = vmatprep.subr.mxu0 0.0
        %2255 = vmatpush1.msra.mxu0 0.0
        %2256 = vmatprep.subr.mxu0 0.0
        %2257 = vmatpush1.msra.mxu0 0.0
        %2258 = vmatprep.subr.mxu0 0.0
        %2259 = vmatpush1.msra.mxu0 0.0
        %2260 = vmatprep.subr.mxu0 0.0
        %2261 = vmatpush1.msra.mxu0 0.0
        %2262 = vmatprep.subr.mxu0 0.0
        %2263 = vmatpush1.msra.mxu0 0.0
        %2264 = vmatprep.subr.mxu0 0.0
        %2265 = vmatpush1.msra.mxu0 0.0
        %2266 = vmatprep.subr.mxu0 0.0
        %2267 = vmatpush1.msra.mxu0 0.0
        %2268 = vmatprep.subr.mxu0 0.0
        %2269 = vmatpush1.msra.mxu0 0.0
        %2270 = vmatprep.subr.mxu0 0.0
        %2271 = vmatpush1.msra.mxu0 0.0
        %2272 = vmatprep.subr.mxu0 0.0
        %2273 = vmatpush1.msra.mxu0 0.0
        %2274 = vmatprep.subr.mxu0 0.0
        %2275 = vmatpush1.msra.mxu0 0.0
        %2276 = vmatprep.subr.mxu0 0.0
        %2277 = vmatpush1.msra.mxu0 0.0
        %2278 = vmatprep.subr.mxu0 0.0
        %2279 = vmatpush1.msra.mxu0 0.0
        %2280 = vmatprep.subr.mxu0 0.0
        %2281 = vmatpush1.msra.mxu0 0.0
        %2282 = vmatprep.subr.mxu0 0.0
        %2283 = vmatpush1.msra.mxu0 0.0
        %2284 = vmatprep.subr.mxu0 0.0
        %2285 = vmatpush1.msra.mxu0 0.0
        %2286 = vmatprep.mubr.f32.mxu0 0.0
        %2287 = vmatmul.mubr.f32.gmra.mrb[0].mxu0 %v2220
        %v2288 = vpop.f32.mrb[0].mxu0
        %v2289 = vadd.f32 %v2218, %v2288
        %v2290 = vpop.f32.mrb[0].mxu0
        %2291 = vdwg.mxu0
        %v2292 = vmax.f32 %v2289, 0.0
        %v2293 = vld [vmem:[#allocation17 + $0x21] sm:$0x1]
        %v2294 = vld [vmem:[#allocation17 + $0x22] sm:$0x1]
        %2296 = vset.pattern.permute.xlu0 0
        %2297 = vperm.xlu0 %2296, %v2294
        %v2298 = vpop.permute.xlu0 %2297
        %vm2300 = vcmask 130048
        %v2302 = vsel %vm2300, %v2293, 0
        %v2305 = vsel %vm2300, %v2292, 0
        %2307 = vmatprep.subr.mxu0 0.0
        %2308 = vmatpush1.xpose.msra.mxu0 %v2305
        %2309 = vmatprep.subr.mxu0 0.0
        %2310 = vmatpush1.xpose.msra.mxu0 0.0
        %2311 = vmatprep.subr.mxu0 0.0
        %2312 = vmatpush1.xpose.msra.mxu0 0.0
        %2313 = vmatprep.subr.mxu0 0.0
        %2314 = vmatpush1.xpose.msra.mxu0 0.0
        %2315 = vmatprep.subr.mxu0 0.0
        %2316 = vmatpush1.xpose.msra.mxu0 0.0
        %2317 = vmatprep.subr.mxu0 0.0
        %2318 = vmatpush1.xpose.msra.mxu0 0.0
        %2319 = vmatprep.subr.mxu0 0.0
        %2320 = vmatpush1.xpose.msra.mxu0 0.0
        %2321 = vmatprep.subr.mxu0 0.0
        %2322 = vmatpush1.xpose.msra.mxu0 0.0
        %2323 = vmatprep.subr.mxu0 0.0
        %2324 = vmatpush1.xpose.msra.mxu0 0.0
        %2325 = vmatprep.subr.mxu0 0.0
        %2326 = vmatpush1.xpose.msra.mxu0 0.0
        %2327 = vmatprep.subr.mxu0 0.0
        %2328 = vmatpush1.xpose.msra.mxu0 0.0
        %2329 = vmatprep.subr.mxu0 0.0
        %2330 = vmatpush1.xpose.msra.mxu0 0.0
        %2331 = vmatprep.subr.mxu0 0.0
        %2332 = vmatpush1.xpose.msra.mxu0 0.0
        %2333 = vmatprep.subr.mxu0 0.0
        %2334 = vmatpush1.xpose.msra.mxu0 0.0
        %2335 = vmatprep.subr.mxu0 0.0
        %2336 = vmatpush1.xpose.msra.mxu0 0.0
        %2337 = vmatprep.subr.mxu0 0.0
        %2338 = vmatpush1.xpose.msra.mxu0 0.0
        %2339 = vmatprep.subr.mxu0 0.0
        %2340 = vmatpush1.xpose.msra.mxu0 0.0
        %2341 = vmatprep.subr.mxu0 0.0
        %2342 = vmatpush1.xpose.msra.mxu0 0.0
        %2343 = vmatprep.subr.mxu0 0.0
        %2344 = vmatpush1.xpose.msra.mxu0 0.0
        %2345 = vmatprep.subr.mxu0 0.0
        %2346 = vmatpush1.xpose.msra.mxu0 0.0
        %2347 = vmatprep.subr.mxu0 0.0
        %2348 = vmatpush1.xpose.msra.mxu0 0.0
        %2349 = vmatprep.subr.mxu0 0.0
        %2350 = vmatpush1.xpose.msra.mxu0 0.0
        %2351 = vmatprep.subr.mxu0 0.0
        %2352 = vmatpush1.xpose.msra.mxu0 0.0
        %2353 = vmatprep.subr.mxu0 0.0
        %2354 = vmatpush1.xpose.msra.mxu0 0.0
        %2355 = vmatprep.subr.mxu0 0.0
        %2356 = vmatpush1.xpose.msra.mxu0 0.0
        %2357 = vmatprep.subr.mxu0 0.0
        %2358 = vmatpush1.xpose.msra.mxu0 0.0
        %2359 = vmatprep.subr.mxu0 0.0
        %2360 = vmatpush1.xpose.msra.mxu0 0.0
        %2361 = vmatprep.subr.mxu0 0.0
        %2362 = vmatpush1.xpose.msra.mxu0 0.0
        %2363 = vmatprep.subr.mxu0 0.0
        %2364 = vmatpush1.xpose.msra.mxu0 0.0
        %2365 = vmatprep.subr.mxu0 0.0
        %2366 = vmatpush1.xpose.msra.mxu0 0.0
        %2367 = vmatprep.subr.mxu0 0.0
        %2368 = vmatpush1.xpose.msra.mxu0 0.0
        %2369 = vmatprep.subr.mxu0 0.0
        %2370 = vmatpush1.xpose.msra.mxu0 0.0
        %2371 = vmatprep.mubr.f32.mxu0 0.0
        %2372 = vmatmul.mubr.f32.gmra.mrb[0].mxu0 %v2302
        %v2373 = vpop.f32.mrb[0].mxu0
        %v2374 = vadd.f32 %v2298, %v2373
        %v2375 = vpop.f32.mrb[0].mxu0
        %2376 = vdwg.mxu0
        %v2377 = vxor.u32 %v2374, 2147483648
        %v2378 = vmul.f32 %v2377, 1.442695
        %v2379 = vpow.pop %v2378
        %v2380 = vadd.f32 %v2379, 1.0
        %v2381 = vrcp.pop %v2380
        %v2382 = vmul.f32 1.0, %v2381
        %v2383 = vmul.f32 %v2382, %v628
        %2384 = vst.msk [vmem:[%s607] sm:$0x1] %vm630, %v2383
        %s2385 = sand.u32 %s286, 1
        %s2386 = scalar_lea.sflag [#allocation4], %s2385
        %s2387 = sand.u32 %s286, 1
        %s2388 = scalar_lea.vmem [#allocation19], %s2387
        // Predicated region
        $region101: #{tpu_custom_call.1} parent=59 // pred_check
          %p2389 = pneg %p296
        $region102: #{tpu_custom_call.1} parent=59 // pred_check_branch
          %2391 = sbr.rel (%p2389) target = $region104
        $region103: #{tpu_custom_call.1} parent=59 // pred_region
          %s2393 = ssub.s32 16, 16
          %2394 = vsyncadd %s2386, %s2393
          %s2395 = smul.addr %s38, 16
          %s2396 = scalar_lea.hbm %s10, %s2395
          %s2398 = sshll.u32 %s2388, 4
          %s2399 = int_to_ptr.vmem [resolvable:$true] %s2398
          %2401 = dma.vmem_to_hbm [thread:$0]  %s2399, 16, %s2396, %s2386
        $region104: #{tpu_custom_call.1} parent=59 // pred_fallthru
          _
      $region60: #{tpu_custom_call.1} parent=5 // pred_fallthru
        _
      %p2402 = scmp.le.s32.totalorder 2, %s33
      // Predicated region
      $region105: #{tpu_custom_call.1} parent=5 // pred_check
        %p2403 = pneg %p2402
      $region106: #{tpu_custom_call.1} parent=5 // pred_check_branch
        %2405 = sbr.rel (%p2403) target = $region108
      $region107: #{tpu_custom_call.1} parent=5 // pred_region
        %s2406 = ssub.s32 %s33, 2
        // Predicated region
        $region109: #{tpu_custom_call.1} parent=107 // pred_check
          %p2407 = pneg %p302
        $region110: #{tpu_custom_call.1} parent=107 // pred_check_branch
          %2409 = sbr.rel (%p2407) target = $region112
        $region111: #{tpu_custom_call.1} parent=107 // pred_region
          %s2410 = sand.u32 %s287, 1
          %s2411 = scalar_lea.sflag [#allocation4], %s2410
          %s2412 = sand.u32 %s287, 1
          %s2413 = scalar_lea.vmem [#allocation19], %s2412
          %2414 = dma.done %s2411, 16
        $region112: #{tpu_custom_call.1} parent=107 // pred_fallthru
          _
      $region108: #{tpu_custom_call.1} parent=5 // pred_fallthru
        _
    $region6: #{tpu_custom_call.1} parent=1 // loop_footer
      %s37 = sadd.s32 1, %s33
    $region7: #{tpu_custom_call.1} parent=1 // loop_footer_branch
      %32 = sbr.rel target = $region3
    $region8: #{tpu_custom_call.1} parent=1 // loop_exit
      _
    %2415 = vsyncpa [#allocation3], 1
    %s2416 = scalar_lea.sflag [#allocation3], 1
    %2417 = vsyncpa %s2416, 1
    %2418 = vsyncpa [#allocation6], 1
    %s2419 = scalar_lea.sflag [#allocation6], 1
    %2420 = vsyncpa %s2419, 1
    %2421 = vsyncpa [#allocation9], 1
    %s2422 = scalar_lea.sflag [#allocation9], 1
    %2423 = vsyncpa %s2422, 1
    %2424 = vsyncpa [#allocation12], 1
    %s2425 = scalar_lea.sflag [#allocation12], 1
    %2426 = vsyncpa %s2425, 1
    %2427 = vsyncpa [#allocation15], 1
    %2428 = vsyncpa [#allocation18], 1
    %2429 = vsyncpa [#allocation4], 1
    %s2430 = scalar_lea.sflag [#allocation4], 1
    %2431 = vsyncpa %s2430, 1

</llo_original>
